<compile_context>
chip_gen: v7x
topology: tpu7x:2x2x1
jax: 0.10.0
libtpu: 0.0.40
codegen_flags: <defaults>
</compile_context>

<pallas_src>
import jax
import jax.numpy as jnp
from jax.experimental import pallas as pl
from jax.experimental.pallas import tpu as pltpu  # noqa: F401 (TPU backend)


def lstm_recurrence_kernel(xp_ref, whh_ref, wfc_ref, bfc_ref, out_ref):
    """Whole LSTM recurrence + mean-over-time + fc + sigmoid in one invocation.

    xp_ref  : (T, B, 4H) f32       precomputed x_t @ W_ih^T + (b_ih + b_hh)
    whh_ref : (H, 4H)    bf16/f32  hidden->gates weights (transposed)
    wfc_ref : (1, H)     f32       final linear weight as a lane-dense row
    bfc_ref : (1, 1)     f32       final linear bias
    out_ref : (B, 1)     f32       sigmoid(fc(mean_t h_t))
    """
    T, B, H4 = xp_ref.shape
    H = H4 // 4
    whh = whh_ref[...]          # hoist the weight load out of the serial loop

    def step(t, carry):
        h, c, s = carry         # all f32 (B, H)
        # Only the hidden->gates matmul remains on the serial critical path.
        gates = xp_ref[t] + jnp.dot(h.astype(whh.dtype), whh,
                                    preferred_element_type=jnp.float32)
        # PyTorch LSTM gate order: i, f, g, o (gate math kept in f32).
        i_g = jax.nn.sigmoid(gates[:, 0 * H:1 * H])
        f_g = jax.nn.sigmoid(gates[:, 1 * H:2 * H])
        g_g = jnp.tanh(gates[:, 2 * H:3 * H])
        o_g = jax.nn.sigmoid(gates[:, 3 * H:4 * H])
        c_new = f_g * c + i_g * g_g
        h_new = o_g * jnp.tanh(c_new)
        return h_new, c_new, s + h_new

    zeros = jnp.zeros((B, H), jnp.float32)
    _, _, h_sum = jax.lax.fori_loop(0, T, step, (zeros, zeros, zeros),
                                    unroll=(T <= 32))

    mean_h = h_sum * (1.0 / T)                      # torch.mean over time
    # NOTE: dropout is identity in eval mode (inference semantics).
    # TODO(synk): training-mode dropout (Bernoulli mask / (1-p)) not implemented.
    # Linear(H, 1) as lane-wise multiply + cross-lane reduce (avoids an N=1 matmul).
    logits = jnp.sum(mean_h * wfc_ref[...], axis=-1, keepdims=True) + bfc_ref[...]
    out_ref[...] = jax.nn.sigmoid(logits)


def prepare_params(params, compute_dtype=jnp.bfloat16):
    """One-time (inference) weight prep: transpose, combine biases, cast MXU operands."""
    H = params["w_hh"].shape[1]
    return {
        "embedding": params["embedding"].astype(jnp.float32),          # (V, H)
        "wih_t": params["w_ih"].T.astype(compute_dtype),               # (H, 4H)
        "whh_t": params["w_hh"].T.astype(compute_dtype),               # (H, 4H)
        "bias": (params["b_ih"] + params["b_hh"]).astype(jnp.float32).reshape(1, 4 * H),
        "wfc_row": params["w_fc"].astype(jnp.float32).reshape(1, H),   # (1, H)
        "bfc": params["b_fc"].astype(jnp.float32).reshape(1, 1),       # (1, 1)
    }


@jax.jit
def lstm_model_forward(x_ids, prep):
    # Time-major (T, B, H) gather straight from the (tiny) transposed index array.
    emb_tbh = prep["embedding"][x_ids.T]
    T, B, H = emb_tbh.shape
    cd = prep["whh_t"].dtype

    # Hoisted input projection: one big parallel matmul with M = T*B (f32 accum).
    x_proj = (jnp.dot(emb_tbh.reshape(T * B, H).astype(cd), prep["wih_t"],
                      preferred_element_type=jnp.float32)
              + prep["bias"]).reshape(T, B, 4 * H)

    # Single grid-less pallas_call: every operand is whole-array VMEM-resident.
    return pl.pallas_call(
        lstm_recurrence_kernel,
        out_shape=jax.ShapeDtypeStruct((B, 1), jnp.float32),
    )(x_proj, prep["whh_t"], prep["wfc_row"], prep["bfc"])


def reference_forward(x_ids, params):
    """Pure-JAX f32 reference mirroring the PyTorch module (eval mode)."""
    emb = params["embedding"][x_ids]                 # (B, T, H)
    B, T, H = emb.shape
    wih, whh = params["w_ih"], params["w_hh"]
    bias = params["b_ih"] + params["b_hh"]

    def step(carry, x_t):
        h, c = carry
        gates = x_t @ wih.T + h @ whh.T + bias
        i = jax.nn.sigmoid(gates[:, 0 * H:1 * H])
        f = jax.nn.sigmoid(gates[:, 1 * H:2 * H])
        g = jnp.tanh(gates[:, 2 * H:3 * H])
        o = jax.nn.sigmoid(gates[:, 3 * H:4 * H])
        c = f * c + i * g
        h = o * jnp.tanh(c)
        return (h, c), h

    h0 = jnp.zeros((B, H), jnp.float32)
    (_, _), hs = jax.lax.scan(step, (h0, h0), jnp.transpose(emb, (1, 0, 2)))
    mean_h = jnp.mean(hs, axis=0)
    logits = mean_h @ params["w_fc"].T + params["b_fc"]
    return jax.nn.sigmoid(logits)


def init_params(key, max_features, hidden_dim):
    H = hidden_dim
    ks = jax.random.split(key, 7)
    bound = 1.0 / jnp.sqrt(H)
    u = lambda k, shape: jax.random.uniform(k, shape, jnp.float32, -bound, bound)
    return {
        "embedding": jax.random.normal(ks[0], (max_features, H), jnp.float32),
        "w_ih": u(ks[1], (4 * H, H)),
        "w_hh": u(ks[2], (4 * H, H)),
        "b_ih": u(ks[3], (4 * H,)),
        "b_hh": u(ks[4], (4 * H,)),
        "w_fc": u(ks[5], (1, H)),
        "b_fc": u(ks[6], (1,)),
    }


if __name__ == "__main__":
    MAX_FEATURES = 64
    HIDDEN = 128
    B, T = 8, 8

    key = jax.random.PRNGKey(0)
    pkey, xkey = jax.random.split(key)
    params = init_params(pkey, MAX_FEATURES, HIDDEN)
    x_ids = jax.random.randint(xkey, (B, T), 0, MAX_FEATURES, dtype=jnp.int32)

    ref = jax.block_until_ready(reference_forward(x_ids, params))

    # (1) f32 MXU operands: tight semantic check against the pure-JAX reference.
    prep_f32 = prepare_params(params, compute_dtype=jnp.float32)
    out_f32 = jax.block_until_ready(lstm_model_forward(x_ids, prep_f32))
    assert out_f32.shape == (B, 1), out_f32.shape
    assert jnp.allclose(out_f32, ref, atol=1e-4, rtol=1e-4), (out_f32, ref)

    # (2) bf16 MXU operands (production path): loose tolerance for bf16 rounding.
    prep_bf16 = prepare_params(params, compute_dtype=jnp.bfloat16)
    out_bf16 = jax.block_until_ready(lstm_model_forward(x_ids, prep_bf16))
    assert out_bf16.shape == (B, 1), out_bf16.shape
    assert jnp.allclose(out_bf16, ref, atol=2e-2, rtol=0), (out_bf16, ref)

    print("KERNEL_OK")
</pallas_src>

<mosaic_0001>
module attributes {stable_mosaic.version = 11 : i64} {
  func.func @lstm_recurrence_kernel(%arg0: memref<8x8x512xf32, #tpu.memory_space<vmem>>, %arg1: memref<128x512xf32, #tpu.memory_space<vmem>>, %arg2: memref<1x128xf32, #tpu.memory_space<vmem>>, %arg3: memref<1x1xf32, #tpu.memory_space<vmem>>, %arg4: memref<8x1xf32, #tpu.memory_space<vmem>>) attributes {dimension_semantics = [], scalar_prefetch = 0 : i64, scratch_operands = 0 : i64, tpu.core_type = #tpu.core_type<tc>} {
    %c0 = arith.constant 0 : index
    %c0_0 = arith.constant 0 : index
    %0 = vector.load %arg1[%c0, %c0_0] : memref<128x512xf32, #tpu.memory_space<vmem>>, vector<128x512xf32>
    %cst = arith.constant 0.000000e+00 : f32
    %1 = vector.broadcast %cst : f32 to vector<8x128xf32>
    %c0_i32 = arith.constant 0 : i32
    %2 = arith.index_cast %c0_i32 : i32 to index
    %c0_1 = arith.constant 0 : index
    %c0_2 = arith.constant 0 : index
    %3 = vector.load %arg0[%2, %c0_1, %c0_2] : memref<8x8x512xf32, #tpu.memory_space<vmem>>, vector<1x8x512xf32>
    %4 = vector.shape_cast %3 : vector<1x8x512xf32> to vector<8x512xf32>
    %cst_3 = arith.constant dense<0.000000e+00> : vector<8x512xf32>
    %5 = tpu.matmul %1, %0, %cst_3 {dimension_numbers = #tpu.dot_dimension_numbers<[1], [0], [0], [1], [0, 0, 1, 1], [], []>} : vector<8x128xf32>, vector<128x512xf32>, vector<8x512xf32> -> vector<8x512xf32>
    %6 = arith.addf %4, %5 : vector<8x512xf32>
    %7 = vector.extract_strided_slice %6 {offsets = [0, 0], sizes = [8, 128], strides = [1, 1]} : vector<8x512xf32> to vector<8x128xf32>
    %8 = arith.negf %7 : vector<8x128xf32>
    %9 = math.exp %8 : vector<8x128xf32>
    %cst_4 = arith.constant 1.000000e+00 : f32
    %10 = vector.broadcast %cst_4 : f32 to vector<8x128xf32>
    %11 = arith.addf %10, %9 : vector<8x128xf32>
    %12 = arith.divf %10, %11 : vector<8x128xf32>
    %13 = vector.extract_strided_slice %6 {offsets = [0, 128], sizes = [8, 128], strides = [1, 1]} : vector<8x512xf32> to vector<8x128xf32>
    %14 = arith.negf %13 : vector<8x128xf32>
    %15 = math.exp %14 : vector<8x128xf32>
    %cst_5 = arith.constant 1.000000e+00 : f32
    %16 = vector.broadcast %cst_5 : f32 to vector<8x128xf32>
    %17 = arith.addf %16, %15 : vector<8x128xf32>
    %18 = arith.divf %16, %17 : vector<8x128xf32>
    %19 = vector.extract_strided_slice %6 {offsets = [0, 256], sizes = [8, 128], strides = [1, 1]} : vector<8x512xf32> to vector<8x128xf32>
    %20 = math.tanh %19 : vector<8x128xf32>
    %21 = vector.extract_strided_slice %6 {offsets = [0, 384], sizes = [8, 128], strides = [1, 1]} : vector<8x512xf32> to vector<8x128xf32>
    %22 = arith.negf %21 : vector<8x128xf32>
    %23 = math.exp %22 : vector<8x128xf32>
    %cst_6 = arith.constant 1.000000e+00 : f32
    %24 = vector.broadcast %cst_6 : f32 to vector<8x128xf32>
    %25 = arith.addf %24, %23 : vector<8x128xf32>
    %26 = arith.divf %24, %25 : vector<8x128xf32>
    %27 = arith.mulf %18, %1 : vector<8x128xf32>
    %28 = arith.mulf %12, %20 : vector<8x128xf32>
    %29 = arith.addf %27, %28 : vector<8x128xf32>
    %30 = math.tanh %29 : vector<8x128xf32>
    %31 = arith.mulf %26, %30 : vector<8x128xf32>
    %32 = arith.addf %1, %31 : vector<8x128xf32>
    %c1_i32 = arith.constant 1 : i32
    %33 = arith.index_cast %c1_i32 : i32 to index
    %c0_7 = arith.constant 0 : index
    %c0_8 = arith.constant 0 : index
    %34 = vector.load %arg0[%33, %c0_7, %c0_8] : memref<8x8x512xf32, #tpu.memory_space<vmem>>, vector<1x8x512xf32>
    %35 = vector.shape_cast %34 : vector<1x8x512xf32> to vector<8x512xf32>
    %cst_9 = arith.constant dense<0.000000e+00> : vector<8x512xf32>
    %36 = tpu.matmul %31, %0, %cst_9 {dimension_numbers = #tpu.dot_dimension_numbers<[1], [0], [0], [1], [0, 0, 1, 1], [], []>} : vector<8x128xf32>, vector<128x512xf32>, vector<8x512xf32> -> vector<8x512xf32>
    %37 = arith.addf %35, %36 : vector<8x512xf32>
    %38 = vector.extract_strided_slice %37 {offsets = [0, 0], sizes = [8, 128], strides = [1, 1]} : vector<8x512xf32> to vector<8x128xf32>
    %39 = arith.negf %38 : vector<8x128xf32>
    %40 = math.exp %39 : vector<8x128xf32>
    %cst_10 = arith.constant 1.000000e+00 : f32
    %41 = vector.broadcast %cst_10 : f32 to vector<8x128xf32>
    %42 = arith.addf %41, %40 : vector<8x128xf32>
    %43 = arith.divf %41, %42 : vector<8x128xf32>
    %44 = vector.extract_strided_slice %37 {offsets = [0, 128], sizes = [8, 128], strides = [1, 1]} : vector<8x512xf32> to vector<8x128xf32>
    %45 = arith.negf %44 : vector<8x128xf32>
    %46 = math.exp %45 : vector<8x128xf32>
    %cst_11 = arith.constant 1.000000e+00 : f32
    %47 = vector.broadcast %cst_11 : f32 to vector<8x128xf32>
    %48 = arith.addf %47, %46 : vector<8x128xf32>
    %49 = arith.divf %47, %48 : vector<8x128xf32>
    %50 = vector.extract_strided_slice %37 {offsets = [0, 256], sizes = [8, 128], strides = [1, 1]} : vector<8x512xf32> to vector<8x128xf32>
    %51 = math.tanh %50 : vector<8x128xf32>
    %52 = vector.extract_strided_slice %37 {offsets = [0, 384], sizes = [8, 128], strides = [1, 1]} : vector<8x512xf32> to vector<8x128xf32>
    %53 = arith.negf %52 : vector<8x128xf32>
    %54 = math.exp %53 : vector<8x128xf32>
    %cst_12 = arith.constant 1.000000e+00 : f32
    %55 = vector.broadcast %cst_12 : f32 to vector<8x128xf32>
    %56 = arith.addf %55, %54 : vector<8x128xf32>
    %57 = arith.divf %55, %56 : vector<8x128xf32>
    %58 = arith.mulf %49, %29 : vector<8x128xf32>
    %59 = arith.mulf %43, %51 : vector<8x128xf32>
    %60 = arith.addf %58, %59 : vector<8x128xf32>
    %61 = math.tanh %60 : vector<8x128xf32>
    %62 = arith.mulf %57, %61 : vector<8x128xf32>
    %63 = arith.addf %32, %62 : vector<8x128xf32>
    %c2_i32 = arith.constant 2 : i32
    %64 = arith.index_cast %c2_i32 : i32 to index
    %c0_13 = arith.constant 0 : index
    %c0_14 = arith.constant 0 : index
    %65 = vector.load %arg0[%64, %c0_13, %c0_14] : memref<8x8x512xf32, #tpu.memory_space<vmem>>, vector<1x8x512xf32>
    %66 = vector.shape_cast %65 : vector<1x8x512xf32> to vector<8x512xf32>
    %cst_15 = arith.constant dense<0.000000e+00> : vector<8x512xf32>
    %67 = tpu.matmul %62, %0, %cst_15 {dimension_numbers = #tpu.dot_dimension_numbers<[1], [0], [0], [1], [0, 0, 1, 1], [], []>} : vector<8x128xf32>, vector<128x512xf32>, vector<8x512xf32> -> vector<8x512xf32>
    %68 = arith.addf %66, %67 : vector<8x512xf32>
    %69 = vector.extract_strided_slice %68 {offsets = [0, 0], sizes = [8, 128], strides = [1, 1]} : vector<8x512xf32> to vector<8x128xf32>
    %70 = arith.negf %69 : vector<8x128xf32>
    %71 = math.exp %70 : vector<8x128xf32>
    %cst_16 = arith.constant 1.000000e+00 : f32
    %72 = vector.broadcast %cst_16 : f32 to vector<8x128xf32>
    %73 = arith.addf %72, %71 : vector<8x128xf32>
    %74 = arith.divf %72, %73 : vector<8x128xf32>
    %75 = vector.extract_strided_slice %68 {offsets = [0, 128], sizes = [8, 128], strides = [1, 1]} : vector<8x512xf32> to vector<8x128xf32>
    %76 = arith.negf %75 : vector<8x128xf32>
    %77 = math.exp %76 : vector<8x128xf32>
    %cst_17 = arith.constant 1.000000e+00 : f32
    %78 = vector.broadcast %cst_17 : f32 to vector<8x128xf32>
    %79 = arith.addf %78, %77 : vector<8x128xf32>
    %80 = arith.divf %78, %79 : vector<8x128xf32>
    %81 = vector.extract_strided_slice %68 {offsets = [0, 256], sizes = [8, 128], strides = [1, 1]} : vector<8x512xf32> to vector<8x128xf32>
    %82 = math.tanh %81 : vector<8x128xf32>
    %83 = vector.extract_strided_slice %68 {offsets = [0, 384], sizes = [8, 128], strides = [1, 1]} : vector<8x512xf32> to vector<8x128xf32>
    %84 = arith.negf %83 : vector<8x128xf32>
    %85 = math.exp %84 : vector<8x128xf32>
    %cst_18 = arith.constant 1.000000e+00 : f32
    %86 = vector.broadcast %cst_18 : f32 to vector<8x128xf32>
    %87 = arith.addf %86, %85 : vector<8x128xf32>
    %88 = arith.divf %86, %87 : vector<8x128xf32>
    %89 = arith.mulf %80, %60 : vector<8x128xf32>
    %90 = arith.mulf %74, %82 : vector<8x128xf32>
    %91 = arith.addf %89, %90 : vector<8x128xf32>
    %92 = math.tanh %91 : vector<8x128xf32>
    %93 = arith.mulf %88, %92 : vector<8x128xf32>
    %94 = arith.addf %63, %93 : vector<8x128xf32>
    %c3_i32 = arith.constant 3 : i32
    %95 = arith.index_cast %c3_i32 : i32 to index
    %c0_19 = arith.constant 0 : index
    %c0_20 = arith.constant 0 : index
    %96 = vector.load %arg0[%95, %c0_19, %c0_20] : memref<8x8x512xf32, #tpu.memory_space<vmem>>, vector<1x8x512xf32>
    %97 = vector.shape_cast %96 : vector<1x8x512xf32> to vector<8x512xf32>
    %cst_21 = arith.constant dense<0.000000e+00> : vector<8x512xf32>
    %98 = tpu.matmul %93, %0, %cst_21 {dimension_numbers = #tpu.dot_dimension_numbers<[1], [0], [0], [1], [0, 0, 1, 1], [], []>} : vector<8x128xf32>, vector<128x512xf32>, vector<8x512xf32> -> vector<8x512xf32>
    %99 = arith.addf %97, %98 : vector<8x512xf32>
    %100 = vector.extract_strided_slice %99 {offsets = [0, 0], sizes = [8, 128], strides = [1, 1]} : vector<8x512xf32> to vector<8x128xf32>
    %101 = arith.negf %100 : vector<8x128xf32>
    %102 = math.exp %101 : vector<8x128xf32>
    %cst_22 = arith.constant 1.000000e+00 : f32
    %103 = vector.broadcast %cst_22 : f32 to vector<8x128xf32>
    %104 = arith.addf %103, %102 : vector<8x128xf32>
    %105 = arith.divf %103, %104 : vector<8x128xf32>
    %106 = vector.extract_strided_slice %99 {offsets = [0, 128], sizes = [8, 128], strides = [1, 1]} : vector<8x512xf32> to vector<8x128xf32>
    %107 = arith.negf %106 : vector<8x128xf32>
    %108 = math.exp %107 : vector<8x128xf32>
    %cst_23 = arith.constant 1.000000e+00 : f32
    %109 = vector.broadcast %cst_23 : f32 to vector<8x128xf32>
    %110 = arith.addf %109, %108 : vector<8x128xf32>
    %111 = arith.divf %109, %110 : vector<8x128xf32>
    %112 = vector.extract_strided_slice %99 {offsets = [0, 256], sizes = [8, 128], strides = [1, 1]} : vector<8x512xf32> to vector<8x128xf32>
    %113 = math.tanh %112 : vector<8x128xf32>
    %114 = vector.extract_strided_slice %99 {offsets = [0, 384], sizes = [8, 128], strides = [1, 1]} : vector<8x512xf32> to vector<8x128xf32>
    %115 = arith.negf %114 : vector<8x128xf32>
    %116 = math.exp %115 : vector<8x128xf32>
    %cst_24 = arith.constant 1.000000e+00 : f32
    %117 = vector.broadcast %cst_24 : f32 to vector<8x128xf32>
    %118 = arith.addf %117, %116 : vector<8x128xf32>
    %119 = arith.divf %117, %118 : vector<8x128xf32>
    %120 = arith.mulf %111, %91 : vector<8x128xf32>
    %121 = arith.mulf %105, %113 : vector<8x128xf32>
    %122 = arith.addf %120, %121 : vector<8x128xf32>
    %123 = math.tanh %122 : vector<8x128xf32>
    %124 = arith.mulf %119, %123 : vector<8x128xf32>
    %125 = arith.addf %94, %124 : vector<8x128xf32>
    %c4_i32 = arith.constant 4 : i32
    %126 = arith.index_cast %c4_i32 : i32 to index
    %c0_25 = arith.constant 0 : index
    %c0_26 = arith.constant 0 : index
    %127 = vector.load %arg0[%126, %c0_25, %c0_26] : memref<8x8x512xf32, #tpu.memory_space<vmem>>, vector<1x8x512xf32>
    %128 = vector.shape_cast %127 : vector<1x8x512xf32> to vector<8x512xf32>
    %cst_27 = arith.constant dense<0.000000e+00> : vector<8x512xf32>
    %129 = tpu.matmul %124, %0, %cst_27 {dimension_numbers = #tpu.dot_dimension_numbers<[1], [0], [0], [1], [0, 0, 1, 1], [], []>} : vector<8x128xf32>, vector<128x512xf32>, vector<8x512xf32> -> vector<8x512xf32>
    %130 = arith.addf %128, %129 : vector<8x512xf32>
    %131 = vector.extract_strided_slice %130 {offsets = [0, 0], sizes = [8, 128], strides = [1, 1]} : vector<8x512xf32> to vector<8x128xf32>
    %132 = arith.negf %131 : vector<8x128xf32>
    %133 = math.exp %132 : vector<8x128xf32>
    %cst_28 = arith.constant 1.000000e+00 : f32
    %134 = vector.broadcast %cst_28 : f32 to vector<8x128xf32>
    %135 = arith.addf %134, %133 : vector<8x128xf32>
    %136 = arith.divf %134, %135 : vector<8x128xf32>
    %137 = vector.extract_strided_slice %130 {offsets = [0, 128], sizes = [8, 128], strides = [1, 1]} : vector<8x512xf32> to vector<8x128xf32>
    %138 = arith.negf %137 : vector<8x128xf32>
    %139 = math.exp %138 : vector<8x128xf32>
    %cst_29 = arith.constant 1.000000e+00 : f32
    %140 = vector.broadcast %cst_29 : f32 to vector<8x128xf32>
    %141 = arith.addf %140, %139 : vector<8x128xf32>
    %142 = arith.divf %140, %141 : vector<8x128xf32>
    %143 = vector.extract_strided_slice %130 {offsets = [0, 256], sizes = [8, 128], strides = [1, 1]} : vector<8x512xf32> to vector<8x128xf32>
    %144 = math.tanh %143 : vector<8x128xf32>
    %145 = vector.extract_strided_slice %130 {offsets = [0, 384], sizes = [8, 128], strides = [1, 1]} : vector<8x512xf32> to vector<8x128xf32>
    %146 = arith.negf %145 : vector<8x128xf32>
    %147 = math.exp %146 : vector<8x128xf32>
    %cst_30 = arith.constant 1.000000e+00 : f32
    %148 = vector.broadcast %cst_30 : f32 to vector<8x128xf32>
    %149 = arith.addf %148, %147 : vector<8x128xf32>
    %150 = arith.divf %148, %149 : vector<8x128xf32>
    %151 = arith.mulf %142, %122 : vector<8x128xf32>
    %152 = arith.mulf %136, %144 : vector<8x128xf32>
    %153 = arith.addf %151, %152 : vector<8x128xf32>
    %154 = math.tanh %153 : vector<8x128xf32>
    %155 = arith.mulf %150, %154 : vector<8x128xf32>
    %156 = arith.addf %125, %155 : vector<8x128xf32>
    %c5_i32 = arith.constant 5 : i32
    %157 = arith.index_cast %c5_i32 : i32 to index
    %c0_31 = arith.constant 0 : index
    %c0_32 = arith.constant 0 : index
    %158 = vector.load %arg0[%157, %c0_31, %c0_32] : memref<8x8x512xf32, #tpu.memory_space<vmem>>, vector<1x8x512xf32>
    %159 = vector.shape_cast %158 : vector<1x8x512xf32> to vector<8x512xf32>
    %cst_33 = arith.constant dense<0.000000e+00> : vector<8x512xf32>
    %160 = tpu.matmul %155, %0, %cst_33 {dimension_numbers = #tpu.dot_dimension_numbers<[1], [0], [0], [1], [0, 0, 1, 1], [], []>} : vector<8x128xf32>, vector<128x512xf32>, vector<8x512xf32> -> vector<8x512xf32>
    %161 = arith.addf %159, %160 : vector<8x512xf32>
    %162 = vector.extract_strided_slice %161 {offsets = [0, 0], sizes = [8, 128], strides = [1, 1]} : vector<8x512xf32> to vector<8x128xf32>
    %163 = arith.negf %162 : vector<8x128xf32>
    %164 = math.exp %163 : vector<8x128xf32>
    %cst_34 = arith.constant 1.000000e+00 : f32
    %165 = vector.broadcast %cst_34 : f32 to vector<8x128xf32>
    %166 = arith.addf %165, %164 : vector<8x128xf32>
    %167 = arith.divf %165, %166 : vector<8x128xf32>
    %168 = vector.extract_strided_slice %161 {offsets = [0, 128], sizes = [8, 128], strides = [1, 1]} : vector<8x512xf32> to vector<8x128xf32>
    %169 = arith.negf %168 : vector<8x128xf32>
    %170 = math.exp %169 : vector<8x128xf32>
    %cst_35 = arith.constant 1.000000e+00 : f32
    %171 = vector.broadcast %cst_35 : f32 to vector<8x128xf32>
    %172 = arith.addf %171, %170 : vector<8x128xf32>
    %173 = arith.divf %171, %172 : vector<8x128xf32>
    %174 = vector.extract_strided_slice %161 {offsets = [0, 256], sizes = [8, 128], strides = [1, 1]} : vector<8x512xf32> to vector<8x128xf32>
    %175 = math.tanh %174 : vector<8x128xf32>
    %176 = vector.extract_strided_slice %161 {offsets = [0, 384], sizes = [8, 128], strides = [1, 1]} : vector<8x512xf32> to vector<8x128xf32>
    %177 = arith.negf %176 : vector<8x128xf32>
    %178 = math.exp %177 : vector<8x128xf32>
    %cst_36 = arith.constant 1.000000e+00 : f32
    %179 = vector.broadcast %cst_36 : f32 to vector<8x128xf32>
    %180 = arith.addf %179, %178 : vector<8x128xf32>
    %181 = arith.divf %179, %180 : vector<8x128xf32>
    %182 = arith.mulf %173, %153 : vector<8x128xf32>
    %183 = arith.mulf %167, %175 : vector<8x128xf32>
    %184 = arith.addf %182, %183 : vector<8x128xf32>
    %185 = math.tanh %184 : vector<8x128xf32>
    %186 = arith.mulf %181, %185 : vector<8x128xf32>
    %187 = arith.addf %156, %186 : vector<8x128xf32>
    %c6_i32 = arith.constant 6 : i32
    %188 = arith.index_cast %c6_i32 : i32 to index
    %c0_37 = arith.constant 0 : index
    %c0_38 = arith.constant 0 : index
    %189 = vector.load %arg0[%188, %c0_37, %c0_38] : memref<8x8x512xf32, #tpu.memory_space<vmem>>, vector<1x8x512xf32>
    %190 = vector.shape_cast %189 : vector<1x8x512xf32> to vector<8x512xf32>
    %cst_39 = arith.constant dense<0.000000e+00> : vector<8x512xf32>
    %191 = tpu.matmul %186, %0, %cst_39 {dimension_numbers = #tpu.dot_dimension_numbers<[1], [0], [0], [1], [0, 0, 1, 1], [], []>} : vector<8x128xf32>, vector<128x512xf32>, vector<8x512xf32> -> vector<8x512xf32>
    %192 = arith.addf %190, %191 : vector<8x512xf32>
    %193 = vector.extract_strided_slice %192 {offsets = [0, 0], sizes = [8, 128], strides = [1, 1]} : vector<8x512xf32> to vector<8x128xf32>
    %194 = arith.negf %193 : vector<8x128xf32>
    %195 = math.exp %194 : vector<8x128xf32>
    %cst_40 = arith.constant 1.000000e+00 : f32
    %196 = vector.broadcast %cst_40 : f32 to vector<8x128xf32>
    %197 = arith.addf %196, %195 : vector<8x128xf32>
    %198 = arith.divf %196, %197 : vector<8x128xf32>
    %199 = vector.extract_strided_slice %192 {offsets = [0, 128], sizes = [8, 128], strides = [1, 1]} : vector<8x512xf32> to vector<8x128xf32>
    %200 = arith.negf %199 : vector<8x128xf32>
    %201 = math.exp %200 : vector<8x128xf32>
    %cst_41 = arith.constant 1.000000e+00 : f32
    %202 = vector.broadcast %cst_41 : f32 to vector<8x128xf32>
    %203 = arith.addf %202, %201 : vector<8x128xf32>
    %204 = arith.divf %202, %203 : vector<8x128xf32>
    %205 = vector.extract_strided_slice %192 {offsets = [0, 256], sizes = [8, 128], strides = [1, 1]} : vector<8x512xf32> to vector<8x128xf32>
    %206 = math.tanh %205 : vector<8x128xf32>
    %207 = vector.extract_strided_slice %192 {offsets = [0, 384], sizes = [8, 128], strides = [1, 1]} : vector<8x512xf32> to vector<8x128xf32>
    %208 = arith.negf %207 : vector<8x128xf32>
    %209 = math.exp %208 : vector<8x128xf32>
    %cst_42 = arith.constant 1.000000e+00 : f32
    %210 = vector.broadcast %cst_42 : f32 to vector<8x128xf32>
    %211 = arith.addf %210, %209 : vector<8x128xf32>
    %212 = arith.divf %210, %211 : vector<8x128xf32>
    %213 = arith.mulf %204, %184 : vector<8x128xf32>
    %214 = arith.mulf %198, %206 : vector<8x128xf32>
    %215 = arith.addf %213, %214 : vector<8x128xf32>
    %216 = math.tanh %215 : vector<8x128xf32>
    %217 = arith.mulf %212, %216 : vector<8x128xf32>
    %218 = arith.addf %187, %217 : vector<8x128xf32>
    %c7_i32 = arith.constant 7 : i32
    %219 = arith.index_cast %c7_i32 : i32 to index
    %c0_43 = arith.constant 0 : index
    %c0_44 = arith.constant 0 : index
    %220 = vector.load %arg0[%219, %c0_43, %c0_44] : memref<8x8x512xf32, #tpu.memory_space<vmem>>, vector<1x8x512xf32>
    %221 = vector.shape_cast %220 : vector<1x8x512xf32> to vector<8x512xf32>
    %cst_45 = arith.constant dense<0.000000e+00> : vector<8x512xf32>
    %222 = tpu.matmul %217, %0, %cst_45 {dimension_numbers = #tpu.dot_dimension_numbers<[1], [0], [0], [1], [0, 0, 1, 1], [], []>} : vector<8x128xf32>, vector<128x512xf32>, vector<8x512xf32> -> vector<8x512xf32>
    %223 = arith.addf %221, %222 : vector<8x512xf32>
    %224 = vector.extract_strided_slice %223 {offsets = [0, 0], sizes = [8, 128], strides = [1, 1]} : vector<8x512xf32> to vector<8x128xf32>
    %225 = arith.negf %224 : vector<8x128xf32>
    %226 = math.exp %225 : vector<8x128xf32>
    %cst_46 = arith.constant 1.000000e+00 : f32
    %227 = vector.broadcast %cst_46 : f32 to vector<8x128xf32>
    %228 = arith.addf %227, %226 : vector<8x128xf32>
    %229 = arith.divf %227, %228 : vector<8x128xf32>
    %230 = vector.extract_strided_slice %223 {offsets = [0, 128], sizes = [8, 128], strides = [1, 1]} : vector<8x512xf32> to vector<8x128xf32>
    %231 = arith.negf %230 : vector<8x128xf32>
    %232 = math.exp %231 : vector<8x128xf32>
    %cst_47 = arith.constant 1.000000e+00 : f32
    %233 = vector.broadcast %cst_47 : f32 to vector<8x128xf32>
    %234 = arith.addf %233, %232 : vector<8x128xf32>
    %235 = arith.divf %233, %234 : vector<8x128xf32>
    %236 = vector.extract_strided_slice %223 {offsets = [0, 256], sizes = [8, 128], strides = [1, 1]} : vector<8x512xf32> to vector<8x128xf32>
    %237 = math.tanh %236 : vector<8x128xf32>
    %238 = vector.extract_strided_slice %223 {offsets = [0, 384], sizes = [8, 128], strides = [1, 1]} : vector<8x512xf32> to vector<8x128xf32>
    %239 = arith.negf %238 : vector<8x128xf32>
    %240 = math.exp %239 : vector<8x128xf32>
    %cst_48 = arith.constant 1.000000e+00 : f32
    %241 = vector.broadcast %cst_48 : f32 to vector<8x128xf32>
    %242 = arith.addf %241, %240 : vector<8x128xf32>
    %243 = arith.divf %241, %242 : vector<8x128xf32>
    %244 = arith.mulf %235, %215 : vector<8x128xf32>
    %245 = arith.mulf %229, %237 : vector<8x128xf32>
    %246 = arith.addf %244, %245 : vector<8x128xf32>
    %247 = math.tanh %246 : vector<8x128xf32>
    %248 = arith.mulf %243, %247 : vector<8x128xf32>
    %249 = arith.addf %218, %248 : vector<8x128xf32>
    %c8_i32 = arith.constant 8 : i32
    %cst_49 = arith.constant 1.250000e-01 : f32
    %250 = vector.broadcast %cst_49 : f32 to vector<8x128xf32>
    %251 = arith.mulf %249, %250 : vector<8x128xf32>
    %c0_50 = arith.constant 0 : index
    %c0_51 = arith.constant 0 : index
    %252 = vector.load %arg2[%c0_50, %c0_51] : memref<1x128xf32, #tpu.memory_space<vmem>>, vector<1x128xf32>
    %253 = vector.broadcast %252 : vector<1x128xf32> to vector<8x128xf32>
    %254 = arith.mulf %251, %253 : vector<8x128xf32>
    %cst_52 = arith.constant dense<0.000000e+00> : vector<8xf32>
    %255 = vector.multi_reduction <add>, %254, %cst_52 [1] : vector<8x128xf32> to vector<8xf32>
    %256 = vector.shape_cast %255 : vector<8xf32> to vector<8x1xf32>
    %c0_53 = arith.constant 0 : index
    %c0_54 = arith.constant 0 : index
    %257 = vector.load %arg3[%c0_53, %c0_54] : memref<1x1xf32, #tpu.memory_space<vmem>>, vector<1x1xf32>
    %258 = vector.broadcast %257 : vector<1x1xf32> to vector<8x1xf32>
    %259 = arith.addf %256, %258 : vector<8x1xf32>
    %260 = arith.negf %259 : vector<8x1xf32>
    %261 = math.exp %260 : vector<8x1xf32>
    %cst_55 = arith.constant 1.000000e+00 : f32
    %262 = vector.broadcast %cst_55 : f32 to vector<8x1xf32>
    %263 = arith.addf %262, %261 : vector<8x1xf32>
    %264 = arith.divf %262, %263 : vector<8x1xf32>
    %c0_56 = arith.constant 0 : index
    %c0_57 = arith.constant 0 : index
    %265 = vector.load %arg4[%c0_56, %c0_57] : memref<8x1xf32, #tpu.memory_space<vmem>>, vector<8x1xf32>
    tpu.vector_store %arg4[%c0_56, %c0_57], %264 {strides = array<i32>} : memref<8x1xf32, #tpu.memory_space<vmem>>, vector<8x1xf32>,
    return
  }
}

</mosaic_0001>

<llo_original>
// kernel: lstm_model_forward.1
$region0: #{lstm_model_forward.1}
  #allocation0 [shape = 'u32[]', space=smem, size = 0x4, offset = 0x4, fixed_abs, tag = 'smem constant byte address 0x4 - core index']
  #allocation1 [shape = 'u32[144,128]{1,0:T(1,128)}', space=vmem, size = 0x12000, scoped, tag = 'internal scratch']
  #allocation2 [shape = 'f32[1,1]{1,0:T(1,128)S(1)}', space=vmem, size = 0x200, scoped, tag = 'scoped memory for lstm_model_forward.1']
  %s0 = inlined_call_operand.vmem [shape: f32[8,8,512], index: 0, kind: input, shape index: {}]
  %s1 = inlined_call_operand.vmem [shape: f32[128,512], index: 1, kind: input, shape index: {}]
  %s2 = inlined_call_operand.vmem [shape: f32[1,128], index: 2, kind: input, shape index: {}]
  %s3 = inlined_call_operand.<no memory space> [shape: f32[1,1], index: 3, kind: input, shape index: {}]
  %s4 = inlined_call_operand.vmem [shape: f32[8,1], index: 4, kind: output, shape index: {}]
  %s5 = sld [smem:[#allocation0]]
  $region26: #{lstm_model_forward.1} parent=0
    _
  %s7 = ssub.s32 1, %s5
  %s8 = scalar_select 0, %s7, %s5
  %v9 = vstv %s3
  %10 = vst [vmem:[#allocation2] sm:$0x1] %v9
  // Predicated region
  $region2: #{lstm_model_forward.1} parent=0 // pred_check
    _
  $region3: #{lstm_model_forward.1} parent=0 // pred_check_branch
    %12 = sbr.rel (0) target = $region5
  $region4: #{lstm_model_forward.1} parent=0 // pred_region
    _
  $region5: #{lstm_model_forward.1} parent=0 // pred_fallthru
    _
  // Predicated region
  $region6: #{lstm_model_forward.1} parent=0 // pred_check
    _
  $region7: #{lstm_model_forward.1} parent=0 // pred_check_branch
    %14 = sbr.rel (0) target = $region9
  $region8: #{lstm_model_forward.1} parent=0 // pred_region
    _
  $region9: #{lstm_model_forward.1} parent=0 // pred_fallthru
    _
  // Predicated region
  $region10: #{lstm_model_forward.1} parent=0 // pred_check
    _
  $region11: #{lstm_model_forward.1} parent=0 // pred_check_branch
    %16 = sbr.rel (0) target = $region13
  $region12: #{lstm_model_forward.1} parent=0 // pred_region
    _
  $region13: #{lstm_model_forward.1} parent=0 // pred_fallthru
    _
  // Predicated region
  $region14: #{lstm_model_forward.1} parent=0 // pred_check
    _
  $region15: #{lstm_model_forward.1} parent=0 // pred_check_branch
    %18 = sbr.rel (0) target = $region17
  $region16: #{lstm_model_forward.1} parent=0 // pred_region
    _
  $region17: #{lstm_model_forward.1} parent=0 // pred_fallthru
    _
  %v19 = vld [vmem:[%s1] sm:$0xff]
  %v20 = vld [vmem:[%s1 + $0x8] sm:$0xff]
  %v21 = vld [vmem:[%s1 + $0x10] sm:$0xff]
  %v22 = vld [vmem:[%s1 + $0x18] sm:$0xff]
  %v23 = vld [vmem:[%s1 + $0x20] sm:$0xff]
  %v24 = vld [vmem:[%s1 + $0x28] sm:$0xff]
  %v25 = vld [vmem:[%s1 + $0x30] sm:$0xff]
  %v26 = vld [vmem:[%s1 + $0x38] sm:$0xff]
  %v27 = vld [vmem:[%s1 + $0x40] sm:$0xff]
  %v28 = vld [vmem:[%s1 + $0x48] sm:$0xff]
  %v29 = vld [vmem:[%s1 + $0x50] sm:$0xff]
  %v30 = vld [vmem:[%s1 + $0x58] sm:$0xff]
  %v31 = vld [vmem:[%s1 + $0x60] sm:$0xff]
  %v32 = vld [vmem:[%s1 + $0x68] sm:$0xff]
  %v33 = vld [vmem:[%s1 + $0x70] sm:$0xff]
  %v34 = vld [vmem:[%s1 + $0x78] sm:$0xff]
  %v35 = vld [vmem:[%s1 + $0x80] sm:$0xff]
  %v36 = vld [vmem:[%s1 + $0x88] sm:$0xff]
  %v37 = vld [vmem:[%s1 + $0x90] sm:$0xff]
  %v38 = vld [vmem:[%s1 + $0x98] sm:$0xff]
  %v39 = vld [vmem:[%s1 + $0xa0] sm:$0xff]
  %v40 = vld [vmem:[%s1 + $0xa8] sm:$0xff]
  %v41 = vld [vmem:[%s1 + $0xb0] sm:$0xff]
  %v42 = vld [vmem:[%s1 + $0xb8] sm:$0xff]
  %v43 = vld [vmem:[%s1 + $0xc0] sm:$0xff]
  %v44 = vld [vmem:[%s1 + $0xc8] sm:$0xff]
  %v45 = vld [vmem:[%s1 + $0xd0] sm:$0xff]
  %v46 = vld [vmem:[%s1 + $0xd8] sm:$0xff]
  %v47 = vld [vmem:[%s1 + $0xe0] sm:$0xff]
  %v48 = vld [vmem:[%s1 + $0xe8] sm:$0xff]
  %v49 = vld [vmem:[%s1 + $0xf0] sm:$0xff]
  %v50 = vld [vmem:[%s1 + $0xf8] sm:$0xff]
  %v51 = vld [vmem:[%s1 + $0x100] sm:$0xff]
  %v52 = vld [vmem:[%s1 + $0x108] sm:$0xff]
  %v53 = vld [vmem:[%s1 + $0x110] sm:$0xff]
  %v54 = vld [vmem:[%s1 + $0x118] sm:$0xff]
  %v55 = vld [vmem:[%s1 + $0x120] sm:$0xff]
  %v56 = vld [vmem:[%s1 + $0x128] sm:$0xff]
  %v57 = vld [vmem:[%s1 + $0x130] sm:$0xff]
  %v58 = vld [vmem:[%s1 + $0x138] sm:$0xff]
  %v59 = vld [vmem:[%s1 + $0x140] sm:$0xff]
  %v60 = vld [vmem:[%s1 + $0x148] sm:$0xff]
  %v61 = vld [vmem:[%s1 + $0x150] sm:$0xff]
  %v62 = vld [vmem:[%s1 + $0x158] sm:$0xff]
  %v63 = vld [vmem:[%s1 + $0x160] sm:$0xff]
  %v64 = vld [vmem:[%s1 + $0x168] sm:$0xff]
  %v65 = vld [vmem:[%s1 + $0x170] sm:$0xff]
  %v66 = vld [vmem:[%s1 + $0x178] sm:$0xff]
  %v67 = vld [vmem:[%s1 + $0x180] sm:$0xff]
  %v68 = vld [vmem:[%s1 + $0x188] sm:$0xff]
  %v69 = vld [vmem:[%s1 + $0x190] sm:$0xff]
  %v70 = vld [vmem:[%s1 + $0x198] sm:$0xff]
  %v71 = vld [vmem:[%s1 + $0x1a0] sm:$0xff]
  %v72 = vld [vmem:[%s1 + $0x1a8] sm:$0xff]
  %v73 = vld [vmem:[%s1 + $0x1b0] sm:$0xff]
  %v74 = vld [vmem:[%s1 + $0x1b8] sm:$0xff]
  %v75 = vld [vmem:[%s1 + $0x1c0] sm:$0xff]
  %v76 = vld [vmem:[%s1 + $0x1c8] sm:$0xff]
  %v77 = vld [vmem:[%s1 + $0x1d0] sm:$0xff]
  %v78 = vld [vmem:[%s1 + $0x1d8] sm:$0xff]
  %v79 = vld [vmem:[%s1 + $0x1e0] sm:$0xff]
  %v80 = vld [vmem:[%s1 + $0x1e8] sm:$0xff]
  %v81 = vld [vmem:[%s1 + $0x1f0] sm:$0xff]
  %v82 = vld [vmem:[%s1 + $0x1f8] sm:$0xff]
  %v83 = vld [vmem:[%s0] sm:$0xff]
  %v84 = vld [vmem:[%s0 + $0x8] sm:$0xff]
  %v85 = vld [vmem:[%s0 + $0x10] sm:$0xff]
  %v86 = vld [vmem:[%s0 + $0x18] sm:$0xff]
  %87 = vmatprep.subr.mxu0 %v20
  %88 = vmatpush1.msra.mxu0 %v19
  %89 = vmatprep.subr.mxu0 %v24
  %90 = vmatpush1.msra.mxu0 %v23
  %91 = vmatprep.subr.mxu0 %v28
  %92 = vmatpush1.msra.mxu0 %v27
  %93 = vmatprep.subr.mxu0 %v32
  %94 = vmatpush1.msra.mxu0 %v31
  %95 = vmatprep.subr.mxu0 %v36
  %96 = vmatpush1.msra.mxu0 %v35
  %97 = vmatprep.subr.mxu0 %v40
  %98 = vmatpush1.msra.mxu0 %v39
  %99 = vmatprep.subr.mxu0 %v44
  %100 = vmatpush1.msra.mxu0 %v43
  %101 = vmatprep.subr.mxu0 %v48
  %102 = vmatpush1.msra.mxu0 %v47
  %103 = vmatprep.subr.mxu0 %v52
  %104 = vmatpush1.msra.mxu0 %v51
  %105 = vmatprep.subr.mxu0 %v56
  %106 = vmatpush1.msra.mxu0 %v55
  %107 = vmatprep.subr.mxu0 %v60
  %108 = vmatpush1.msra.mxu0 %v59
  %109 = vmatprep.subr.mxu0 %v64
  %110 = vmatpush1.msra.mxu0 %v63
  %111 = vmatprep.subr.mxu0 %v68
  %112 = vmatpush1.msra.mxu0 %v67
  %113 = vmatprep.subr.mxu0 %v72
  %114 = vmatpush1.msra.mxu0 %v71
  %115 = vmatprep.subr.mxu0 %v76
  %116 = vmatpush1.msra.mxu0 %v75
  %117 = vmatprep.subr.mxu0 %v80
  %118 = vmatpush1.msra.mxu0 %v79
  %119 = vmatprep.subr.mxu0 0.0
  %120 = vmatpush1.msra.mxu0 0.0
  %121 = vmatprep.subr.mxu0 0.0
  %122 = vmatpush1.msra.mxu0 0.0
  %123 = vmatprep.subr.mxu0 0.0
  %124 = vmatpush1.msra.mxu0 0.0
  %125 = vmatprep.subr.mxu0 0.0
  %126 = vmatpush1.msra.mxu0 0.0
  %127 = vmatprep.subr.mxu0 0.0
  %128 = vmatpush1.msra.mxu0 0.0
  %129 = vmatprep.subr.mxu0 0.0
  %130 = vmatpush1.msra.mxu0 0.0
  %131 = vmatprep.subr.mxu0 0.0
  %132 = vmatpush1.msra.mxu0 0.0
  %133 = vmatprep.subr.mxu0 0.0
  %134 = vmatpush1.msra.mxu0 0.0
  %135 = vmatprep.subr.mxu0 0.0
  %136 = vmatpush1.msra.mxu0 0.0
  %137 = vmatprep.subr.mxu0 0.0
  %138 = vmatpush1.msra.mxu0 0.0
  %139 = vmatprep.subr.mxu0 0.0
  %140 = vmatpush1.msra.mxu0 0.0
  %141 = vmatprep.subr.mxu0 0.0
  %142 = vmatpush1.msra.mxu0 0.0
  %143 = vmatprep.subr.mxu0 0.0
  %144 = vmatpush1.msra.mxu0 0.0
  %145 = vmatprep.subr.mxu0 0.0
  %146 = vmatpush1.msra.mxu0 0.0
  %147 = vmatprep.subr.mxu0 0.0
  %148 = vmatpush1.msra.mxu0 0.0
  %149 = vmatprep.subr.mxu0 0.0
  %150 = vmatpush1.msra.mxu0 0.0
  %151 = vmatprep.mubr.f32.mxu0 0.0
  %152 = vmatmul.mubr.f32.gmra.mrb[0].mxu0 0.0
  %v153 = vpop.f32.mrb[0].mxu0
  %v154 = vadd.f32 0.0, %v153
  %v155 = vpop.f32.mrb[0].mxu0
  %v156 = vadd.f32 0.0, %v155
  %157 = vdwg.mxu0
  %158 = vmatprep.subr.mxu0 %v22
  %159 = vmatpush1.msra.mxu0 %v21
  %160 = vmatprep.subr.mxu0 %v26
  %161 = vmatpush1.msra.mxu0 %v25
  %162 = vmatprep.subr.mxu0 %v30
  %163 = vmatpush1.msra.mxu0 %v29
  %164 = vmatprep.subr.mxu0 %v34
  %165 = vmatpush1.msra.mxu0 %v33
  %166 = vmatprep.subr.mxu0 %v38
  %167 = vmatpush1.msra.mxu0 %v37
  %168 = vmatprep.subr.mxu0 %v42
  %169 = vmatpush1.msra.mxu0 %v41
  %170 = vmatprep.subr.mxu0 %v46
  %171 = vmatpush1.msra.mxu0 %v45
  %172 = vmatprep.subr.mxu0 %v50
  %173 = vmatpush1.msra.mxu0 %v49
  %174 = vmatprep.subr.mxu0 %v54
  %175 = vmatpush1.msra.mxu0 %v53
  %176 = vmatprep.subr.mxu0 %v58
  %177 = vmatpush1.msra.mxu0 %v57
  %178 = vmatprep.subr.mxu0 %v62
  %179 = vmatpush1.msra.mxu0 %v61
  %180 = vmatprep.subr.mxu0 %v66
  %181 = vmatpush1.msra.mxu0 %v65
  %182 = vmatprep.subr.mxu0 %v70
  %183 = vmatpush1.msra.mxu0 %v69
  %184 = vmatprep.subr.mxu0 %v74
  %185 = vmatpush1.msra.mxu0 %v73
  %186 = vmatprep.subr.mxu0 %v78
  %187 = vmatpush1.msra.mxu0 %v77
  %188 = vmatprep.subr.mxu0 %v82
  %189 = vmatpush1.msra.mxu0 %v81
  %190 = vmatprep.subr.mxu0 0.0
  %191 = vmatpush1.msra.mxu0 0.0
  %192 = vmatprep.subr.mxu0 0.0
  %193 = vmatpush1.msra.mxu0 0.0
  %194 = vmatprep.subr.mxu0 0.0
  %195 = vmatpush1.msra.mxu0 0.0
  %196 = vmatprep.subr.mxu0 0.0
  %197 = vmatpush1.msra.mxu0 0.0
  %198 = vmatprep.subr.mxu0 0.0
  %199 = vmatpush1.msra.mxu0 0.0
  %200 = vmatprep.subr.mxu0 0.0
  %201 = vmatpush1.msra.mxu0 0.0
  %202 = vmatprep.subr.mxu0 0.0
  %203 = vmatpush1.msra.mxu0 0.0
  %204 = vmatprep.subr.mxu0 0.0
  %205 = vmatpush1.msra.mxu0 0.0
  %206 = vmatprep.subr.mxu0 0.0
  %207 = vmatpush1.msra.mxu0 0.0
  %208 = vmatprep.subr.mxu0 0.0
  %209 = vmatpush1.msra.mxu0 0.0
  %210 = vmatprep.subr.mxu0 0.0
  %211 = vmatpush1.msra.mxu0 0.0
  %212 = vmatprep.subr.mxu0 0.0
  %213 = vmatpush1.msra.mxu0 0.0
  %214 = vmatprep.subr.mxu0 0.0
  %215 = vmatpush1.msra.mxu0 0.0
  %216 = vmatprep.subr.mxu0 0.0
  %217 = vmatpush1.msra.mxu0 0.0
  %218 = vmatprep.subr.mxu0 0.0
  %219 = vmatpush1.msra.mxu0 0.0
  %220 = vmatprep.subr.mxu0 0.0
  %221 = vmatpush1.msra.mxu0 0.0
  %222 = vmatprep.mubr.f32.mxu0 0.0
  %223 = vmatmul.mubr.f32.gmra.mrb[0].mxu0 0.0
  %v224 = vpop.f32.mrb[0].mxu0
  %v225 = vadd.f32 0.0, %v224
  %v226 = vpop.f32.mrb[0].mxu0
  %v227 = vadd.f32 0.0, %v226
  %228 = vdwg.mxu0
  %v229 = vadd.f32 %v83, %v154
  %v230 = vadd.f32 %v84, %v156
  %v231 = vadd.f32 %v85, %v225
  %v232 = vadd.f32 %v86, %v227
  %v233 = vxor.u32 %v229, 2147483648
  %v234 = vmul.f32 %v233, 1.442695
  %v235 = vpow.pop %v234
  %v236 = vadd.f32 %v235, 1.0
  %v237 = vrcp.pop %v236
  %v238 = vmul.f32 1.0, %v237
  %v239 = vxor.u32 %v230, 2147483648
  %v240 = vmul.f32 %v239, 1.442695
  %v241 = vpow.pop %v240
  %v242 = vadd.f32 %v241, 1.0
  %v243 = vrcp.pop %v242
  %v244 = vmul.f32 1.0, %v243
  %v245 = vtanh.pop %v231
  %v246 = vxor.u32 %v232, 2147483648
  %v247 = vmul.f32 %v246, 1.442695
  %v248 = vpow.pop %v247
  %v249 = vadd.f32 %v248, 1.0
  %v250 = vrcp.pop %v249
  %v251 = vmul.f32 1.0, %v250
  %v252 = vmul.f32 %v244, 0.0
  %v253 = vmul.f32 %v238, %v245
  %v254 = vadd.f32 %v252, %v253
  %v255 = vtanh.pop %v254
  %v256 = vmul.f32 %v251, %v255
  %v257 = vadd.f32 %v256, 0.0
  %s258 = scalar_lea.vmem %s0, 32
  %v259 = vld [vmem:[%s258] sm:$0xff]
  %v260 = vld [vmem:[%s258 + $0x8] sm:$0xff]
  %v261 = vld [vmem:[%s258 + $0x10] sm:$0xff]
  %v262 = vld [vmem:[%s258 + $0x18] sm:$0xff]
  %263 = vmatprep.subr.mxu0 %v20
  %264 = vmatpush1.msra.mxu0 %v19
  %265 = vmatprep.subr.mxu0 %v24
  %266 = vmatpush1.msra.mxu0 %v23
  %267 = vmatprep.subr.mxu0 %v28
  %268 = vmatpush1.msra.mxu0 %v27
  %269 = vmatprep.subr.mxu0 %v32
  %270 = vmatpush1.msra.mxu0 %v31
  %271 = vmatprep.subr.mxu0 %v36
  %272 = vmatpush1.msra.mxu0 %v35
  %273 = vmatprep.subr.mxu0 %v40
  %274 = vmatpush1.msra.mxu0 %v39
  %275 = vmatprep.subr.mxu0 %v44
  %276 = vmatpush1.msra.mxu0 %v43
  %277 = vmatprep.subr.mxu0 %v48
  %278 = vmatpush1.msra.mxu0 %v47
  %279 = vmatprep.subr.mxu0 %v52
  %280 = vmatpush1.msra.mxu0 %v51
  %281 = vmatprep.subr.mxu0 %v56
  %282 = vmatpush1.msra.mxu0 %v55
  %283 = vmatprep.subr.mxu0 %v60
  %284 = vmatpush1.msra.mxu0 %v59
  %285 = vmatprep.subr.mxu0 %v64
  %286 = vmatpush1.msra.mxu0 %v63
  %287 = vmatprep.subr.mxu0 %v68
  %288 = vmatpush1.msra.mxu0 %v67
  %289 = vmatprep.subr.mxu0 %v72
  %290 = vmatpush1.msra.mxu0 %v71
  %291 = vmatprep.subr.mxu0 %v76
  %292 = vmatpush1.msra.mxu0 %v75
  %293 = vmatprep.subr.mxu0 %v80
  %294 = vmatpush1.msra.mxu0 %v79
  %295 = vmatprep.subr.mxu0 0.0
  %296 = vmatpush1.msra.mxu0 0.0
  %297 = vmatprep.subr.mxu0 0.0
  %298 = vmatpush1.msra.mxu0 0.0
  %299 = vmatprep.subr.mxu0 0.0
  %300 = vmatpush1.msra.mxu0 0.0
  %301 = vmatprep.subr.mxu0 0.0
  %302 = vmatpush1.msra.mxu0 0.0
  %303 = vmatprep.subr.mxu0 0.0
  %304 = vmatpush1.msra.mxu0 0.0
  %305 = vmatprep.subr.mxu0 0.0
  %306 = vmatpush1.msra.mxu0 0.0
  %307 = vmatprep.subr.mxu0 0.0
  %308 = vmatpush1.msra.mxu0 0.0
  %309 = vmatprep.subr.mxu0 0.0
  %310 = vmatpush1.msra.mxu0 0.0
  %311 = vmatprep.subr.mxu0 0.0
  %312 = vmatpush1.msra.mxu0 0.0
  %313 = vmatprep.subr.mxu0 0.0
  %314 = vmatpush1.msra.mxu0 0.0
  %315 = vmatprep.subr.mxu0 0.0
  %316 = vmatpush1.msra.mxu0 0.0
  %317 = vmatprep.subr.mxu0 0.0
  %318 = vmatpush1.msra.mxu0 0.0
  %319 = vmatprep.subr.mxu0 0.0
  %320 = vmatpush1.msra.mxu0 0.0
  %321 = vmatprep.subr.mxu0 0.0
  %322 = vmatpush1.msra.mxu0 0.0
  %323 = vmatprep.subr.mxu0 0.0
  %324 = vmatpush1.msra.mxu0 0.0
  %325 = vmatprep.subr.mxu0 0.0
  %326 = vmatpush1.msra.mxu0 0.0
  %327 = vmatprep.mubr.f32.mxu0 0.0
  %328 = vmatmul.mubr.f32.gmra.mrb[0].mxu0 %v256
  %v329 = vpop.f32.mrb[0].mxu0
  %v330 = vadd.f32 0.0, %v329
  %v331 = vpop.f32.mrb[0].mxu0
  %v332 = vadd.f32 0.0, %v331
  %333 = vdwg.mxu0
  %334 = vmatprep.subr.mxu0 %v22
  %335 = vmatpush1.msra.mxu0 %v21
  %336 = vmatprep.subr.mxu0 %v26
  %337 = vmatpush1.msra.mxu0 %v25
  %338 = vmatprep.subr.mxu0 %v30
  %339 = vmatpush1.msra.mxu0 %v29
  %340 = vmatprep.subr.mxu0 %v34
  %341 = vmatpush1.msra.mxu0 %v33
  %342 = vmatprep.subr.mxu0 %v38
  %343 = vmatpush1.msra.mxu0 %v37
  %344 = vmatprep.subr.mxu0 %v42
  %345 = vmatpush1.msra.mxu0 %v41
  %346 = vmatprep.subr.mxu0 %v46
  %347 = vmatpush1.msra.mxu0 %v45
  %348 = vmatprep.subr.mxu0 %v50
  %349 = vmatpush1.msra.mxu0 %v49
  %350 = vmatprep.subr.mxu0 %v54
  %351 = vmatpush1.msra.mxu0 %v53
  %352 = vmatprep.subr.mxu0 %v58
  %353 = vmatpush1.msra.mxu0 %v57
  %354 = vmatprep.subr.mxu0 %v62
  %355 = vmatpush1.msra.mxu0 %v61
  %356 = vmatprep.subr.mxu0 %v66
  %357 = vmatpush1.msra.mxu0 %v65
  %358 = vmatprep.subr.mxu0 %v70
  %359 = vmatpush1.msra.mxu0 %v69
  %360 = vmatprep.subr.mxu0 %v74
  %361 = vmatpush1.msra.mxu0 %v73
  %362 = vmatprep.subr.mxu0 %v78
  %363 = vmatpush1.msra.mxu0 %v77
  %364 = vmatprep.subr.mxu0 %v82
  %365 = vmatpush1.msra.mxu0 %v81
  %366 = vmatprep.subr.mxu0 0.0
  %367 = vmatpush1.msra.mxu0 0.0
  %368 = vmatprep.subr.mxu0 0.0
  %369 = vmatpush1.msra.mxu0 0.0
  %370 = vmatprep.subr.mxu0 0.0
  %371 = vmatpush1.msra.mxu0 0.0
  %372 = vmatprep.subr.mxu0 0.0
  %373 = vmatpush1.msra.mxu0 0.0
  %374 = vmatprep.subr.mxu0 0.0
  %375 = vmatpush1.msra.mxu0 0.0
  %376 = vmatprep.subr.mxu0 0.0
  %377 = vmatpush1.msra.mxu0 0.0
  %378 = vmatprep.subr.mxu0 0.0
  %379 = vmatpush1.msra.mxu0 0.0
  %380 = vmatprep.subr.mxu0 0.0
  %381 = vmatpush1.msra.mxu0 0.0
  %382 = vmatprep.subr.mxu0 0.0
  %383 = vmatpush1.msra.mxu0 0.0
  %384 = vmatprep.subr.mxu0 0.0
  %385 = vmatpush1.msra.mxu0 0.0
  %386 = vmatprep.subr.mxu0 0.0
  %387 = vmatpush1.msra.mxu0 0.0
  %388 = vmatprep.subr.mxu0 0.0
  %389 = vmatpush1.msra.mxu0 0.0
  %390 = vmatprep.subr.mxu0 0.0
  %391 = vmatpush1.msra.mxu0 0.0
  %392 = vmatprep.subr.mxu0 0.0
  %393 = vmatpush1.msra.mxu0 0.0
  %394 = vmatprep.subr.mxu0 0.0
  %395 = vmatpush1.msra.mxu0 0.0
  %396 = vmatprep.subr.mxu0 0.0
  %397 = vmatpush1.msra.mxu0 0.0
  %398 = vmatprep.mubr.f32.mxu0 0.0
  %399 = vmatmul.mubr.f32.gmra.mrb[0].mxu0 %v256
  %v400 = vpop.f32.mrb[0].mxu0
  %v401 = vadd.f32 0.0, %v400
  %v402 = vpop.f32.mrb[0].mxu0
  %v403 = vadd.f32 0.0, %v402
  %404 = vdwg.mxu0
  %v405 = vadd.f32 %v259, %v330
  %v406 = vadd.f32 %v260, %v332
  %v407 = vadd.f32 %v261, %v401
  %v408 = vadd.f32 %v262, %v403
  %v409 = vxor.u32 %v405, 2147483648
  %v410 = vmul.f32 %v409, 1.442695
  %v411 = vpow.pop %v410
  %v412 = vadd.f32 %v411, 1.0
  %v413 = vrcp.pop %v412
  %v414 = vmul.f32 1.0, %v413
  %v415 = vxor.u32 %v406, 2147483648
  %v416 = vmul.f32 %v415, 1.442695
  %v417 = vpow.pop %v416
  %v418 = vadd.f32 %v417, 1.0
  %v419 = vrcp.pop %v418
  %v420 = vmul.f32 1.0, %v419
  %v421 = vtanh.pop %v407
  %v422 = vxor.u32 %v408, 2147483648
  %v423 = vmul.f32 %v422, 1.442695
  %v424 = vpow.pop %v423
  %v425 = vadd.f32 %v424, 1.0
  %v426 = vrcp.pop %v425
  %v427 = vmul.f32 1.0, %v426
  %v428 = vmul.f32 %v420, %v254
  %v429 = vmul.f32 %v414, %v421
  %v430 = vadd.f32 %v428, %v429
  %v431 = vtanh.pop %v430
  %v432 = vmul.f32 %v427, %v431
  %v433 = vadd.f32 %v257, %v432
  %s434 = scalar_lea.vmem %s0, 64
  %v435 = vld [vmem:[%s434] sm:$0xff]
  %v436 = vld [vmem:[%s434 + $0x8] sm:$0xff]
  %v437 = vld [vmem:[%s434 + $0x10] sm:$0xff]
  %v438 = vld [vmem:[%s434 + $0x18] sm:$0xff]
  %439 = vmatprep.subr.mxu0 %v20
  %440 = vmatpush1.msra.mxu0 %v19
  %441 = vmatprep.subr.mxu0 %v24
  %442 = vmatpush1.msra.mxu0 %v23
  %443 = vmatprep.subr.mxu0 %v28
  %444 = vmatpush1.msra.mxu0 %v27
  %445 = vmatprep.subr.mxu0 %v32
  %446 = vmatpush1.msra.mxu0 %v31
  %447 = vmatprep.subr.mxu0 %v36
  %448 = vmatpush1.msra.mxu0 %v35
  %449 = vmatprep.subr.mxu0 %v40
  %450 = vmatpush1.msra.mxu0 %v39
  %451 = vmatprep.subr.mxu0 %v44
  %452 = vmatpush1.msra.mxu0 %v43
  %453 = vmatprep.subr.mxu0 %v48
  %454 = vmatpush1.msra.mxu0 %v47
  %455 = vmatprep.subr.mxu0 %v52
  %456 = vmatpush1.msra.mxu0 %v51
  %457 = vmatprep.subr.mxu0 %v56
  %458 = vmatpush1.msra.mxu0 %v55
  %459 = vmatprep.subr.mxu0 %v60
  %460 = vmatpush1.msra.mxu0 %v59
  %461 = vmatprep.subr.mxu0 %v64
  %462 = vmatpush1.msra.mxu0 %v63
  %463 = vmatprep.subr.mxu0 %v68
  %464 = vmatpush1.msra.mxu0 %v67
  %465 = vmatprep.subr.mxu0 %v72
  %466 = vmatpush1.msra.mxu0 %v71
  %467 = vmatprep.subr.mxu0 %v76
  %468 = vmatpush1.msra.mxu0 %v75
  %469 = vmatprep.subr.mxu0 %v80
  %470 = vmatpush1.msra.mxu0 %v79
  %471 = vmatprep.subr.mxu0 0.0
  %472 = vmatpush1.msra.mxu0 0.0
  %473 = vmatprep.subr.mxu0 0.0
  %474 = vmatpush1.msra.mxu0 0.0
  %475 = vmatprep.subr.mxu0 0.0
  %476 = vmatpush1.msra.mxu0 0.0
  %477 = vmatprep.subr.mxu0 0.0
  %478 = vmatpush1.msra.mxu0 0.0
  %479 = vmatprep.subr.mxu0 0.0
  %480 = vmatpush1.msra.mxu0 0.0
  %481 = vmatprep.subr.mxu0 0.0
  %482 = vmatpush1.msra.mxu0 0.0
  %483 = vmatprep.subr.mxu0 0.0
  %484 = vmatpush1.msra.mxu0 0.0
  %485 = vmatprep.subr.mxu0 0.0
  %486 = vmatpush1.msra.mxu0 0.0
  %487 = vmatprep.subr.mxu0 0.0
  %488 = vmatpush1.msra.mxu0 0.0
  %489 = vmatprep.subr.mxu0 0.0
  %490 = vmatpush1.msra.mxu0 0.0
  %491 = vmatprep.subr.mxu0 0.0
  %492 = vmatpush1.msra.mxu0 0.0
  %493 = vmatprep.subr.mxu0 0.0
  %494 = vmatpush1.msra.mxu0 0.0
  %495 = vmatprep.subr.mxu0 0.0
  %496 = vmatpush1.msra.mxu0 0.0
  %497 = vmatprep.subr.mxu0 0.0
  %498 = vmatpush1.msra.mxu0 0.0
  %499 = vmatprep.subr.mxu0 0.0
  %500 = vmatpush1.msra.mxu0 0.0
  %501 = vmatprep.subr.mxu0 0.0
  %502 = vmatpush1.msra.mxu0 0.0
  %503 = vmatprep.mubr.f32.mxu0 0.0
  %504 = vmatmul.mubr.f32.gmra.mrb[0].mxu0 %v432
  %v505 = vpop.f32.mrb[0].mxu0
  %v506 = vadd.f32 0.0, %v505
  %v507 = vpop.f32.mrb[0].mxu0
  %v508 = vadd.f32 0.0, %v507
  %509 = vdwg.mxu0
  %510 = vmatprep.subr.mxu0 %v22
  %511 = vmatpush1.msra.mxu0 %v21
  %512 = vmatprep.subr.mxu0 %v26
  %513 = vmatpush1.msra.mxu0 %v25
  %514 = vmatprep.subr.mxu0 %v30
  %515 = vmatpush1.msra.mxu0 %v29
  %516 = vmatprep.subr.mxu0 %v34
  %517 = vmatpush1.msra.mxu0 %v33
  %518 = vmatprep.subr.mxu0 %v38
  %519 = vmatpush1.msra.mxu0 %v37
  %520 = vmatprep.subr.mxu0 %v42
  %521 = vmatpush1.msra.mxu0 %v41
  %522 = vmatprep.subr.mxu0 %v46
  %523 = vmatpush1.msra.mxu0 %v45
  %524 = vmatprep.subr.mxu0 %v50
  %525 = vmatpush1.msra.mxu0 %v49
  %526 = vmatprep.subr.mxu0 %v54
  %527 = vmatpush1.msra.mxu0 %v53
  %528 = vmatprep.subr.mxu0 %v58
  %529 = vmatpush1.msra.mxu0 %v57
  %530 = vmatprep.subr.mxu0 %v62
  %531 = vmatpush1.msra.mxu0 %v61
  %532 = vmatprep.subr.mxu0 %v66
  %533 = vmatpush1.msra.mxu0 %v65
  %534 = vmatprep.subr.mxu0 %v70
  %535 = vmatpush1.msra.mxu0 %v69
  %536 = vmatprep.subr.mxu0 %v74
  %537 = vmatpush1.msra.mxu0 %v73
  %538 = vmatprep.subr.mxu0 %v78
  %539 = vmatpush1.msra.mxu0 %v77
  %540 = vmatprep.subr.mxu0 %v82
  %541 = vmatpush1.msra.mxu0 %v81
  %542 = vmatprep.subr.mxu0 0.0
  %543 = vmatpush1.msra.mxu0 0.0
  %544 = vmatprep.subr.mxu0 0.0
  %545 = vmatpush1.msra.mxu0 0.0
  %546 = vmatprep.subr.mxu0 0.0
  %547 = vmatpush1.msra.mxu0 0.0
  %548 = vmatprep.subr.mxu0 0.0
  %549 = vmatpush1.msra.mxu0 0.0
  %550 = vmatprep.subr.mxu0 0.0
  %551 = vmatpush1.msra.mxu0 0.0
  %552 = vmatprep.subr.mxu0 0.0
  %553 = vmatpush1.msra.mxu0 0.0
  %554 = vmatprep.subr.mxu0 0.0
  %555 = vmatpush1.msra.mxu0 0.0
  %556 = vmatprep.subr.mxu0 0.0
  %557 = vmatpush1.msra.mxu0 0.0
  %558 = vmatprep.subr.mxu0 0.0
  %559 = vmatpush1.msra.mxu0 0.0
  %560 = vmatprep.subr.mxu0 0.0
  %561 = vmatpush1.msra.mxu0 0.0
  %562 = vmatprep.subr.mxu0 0.0
  %563 = vmatpush1.msra.mxu0 0.0
  %564 = vmatprep.subr.mxu0 0.0
  %565 = vmatpush1.msra.mxu0 0.0
  %566 = vmatprep.subr.mxu0 0.0
  %567 = vmatpush1.msra.mxu0 0.0
  %568 = vmatprep.subr.mxu0 0.0
  %569 = vmatpush1.msra.mxu0 0.0
  %570 = vmatprep.subr.mxu0 0.0
  %571 = vmatpush1.msra.mxu0 0.0
  %572 = vmatprep.subr.mxu0 0.0
  %573 = vmatpush1.msra.mxu0 0.0
  %574 = vmatprep.mubr.f32.mxu0 0.0
  %575 = vmatmul.mubr.f32.gmra.mrb[0].mxu0 %v432
  %v576 = vpop.f32.mrb[0].mxu0
  %v577 = vadd.f32 0.0, %v576
  %v578 = vpop.f32.mrb[0].mxu0
  %v579 = vadd.f32 0.0, %v578
  %580 = vdwg.mxu0
  %v581 = vadd.f32 %v435, %v506
  %v582 = vadd.f32 %v436, %v508
  %v583 = vadd.f32 %v437, %v577
  %v584 = vadd.f32 %v438, %v579
  %v585 = vxor.u32 %v581, 2147483648
  %v586 = vmul.f32 %v585, 1.442695
  %v587 = vpow.pop %v586
  %v588 = vadd.f32 %v587, 1.0
  %v589 = vrcp.pop %v588
  %v590 = vmul.f32 1.0, %v589
  %v591 = vxor.u32 %v582, 2147483648
  %v592 = vmul.f32 %v591, 1.442695
  %v593 = vpow.pop %v592
  %v594 = vadd.f32 %v593, 1.0
  %v595 = vrcp.pop %v594
  %v596 = vmul.f32 1.0, %v595
  %v597 = vtanh.pop %v583
  %v598 = vxor.u32 %v584, 2147483648
  %v599 = vmul.f32 %v598, 1.442695
  %v600 = vpow.pop %v599
  %v601 = vadd.f32 %v600, 1.0
  %v602 = vrcp.pop %v601
  %v603 = vmul.f32 1.0, %v602
  %v604 = vmul.f32 %v596, %v430
  %v605 = vmul.f32 %v590, %v597
  %v606 = vadd.f32 %v604, %v605
  %v607 = vtanh.pop %v606
  %v608 = vmul.f32 %v603, %v607
  %v609 = vadd.f32 %v433, %v608
  %s610 = scalar_lea.vmem %s0, 96
  %v611 = vld [vmem:[%s610] sm:$0xff]
  %v612 = vld [vmem:[%s610 + $0x8] sm:$0xff]
  %v613 = vld [vmem:[%s610 + $0x10] sm:$0xff]
  %v614 = vld [vmem:[%s610 + $0x18] sm:$0xff]
  %615 = vmatprep.subr.mxu0 %v20
  %616 = vmatpush1.msra.mxu0 %v19
  %617 = vmatprep.subr.mxu0 %v24
  %618 = vmatpush1.msra.mxu0 %v23
  %619 = vmatprep.subr.mxu0 %v28
  %620 = vmatpush1.msra.mxu0 %v27
  %621 = vmatprep.subr.mxu0 %v32
  %622 = vmatpush1.msra.mxu0 %v31
  %623 = vmatprep.subr.mxu0 %v36
  %624 = vmatpush1.msra.mxu0 %v35
  %625 = vmatprep.subr.mxu0 %v40
  %626 = vmatpush1.msra.mxu0 %v39
  %627 = vmatprep.subr.mxu0 %v44
  %628 = vmatpush1.msra.mxu0 %v43
  %629 = vmatprep.subr.mxu0 %v48
  %630 = vmatpush1.msra.mxu0 %v47
  %631 = vmatprep.subr.mxu0 %v52
  %632 = vmatpush1.msra.mxu0 %v51
  %633 = vmatprep.subr.mxu0 %v56
  %634 = vmatpush1.msra.mxu0 %v55
  %635 = vmatprep.subr.mxu0 %v60
  %636 = vmatpush1.msra.mxu0 %v59
  %637 = vmatprep.subr.mxu0 %v64
  %638 = vmatpush1.msra.mxu0 %v63
  %639 = vmatprep.subr.mxu0 %v68
  %640 = vmatpush1.msra.mxu0 %v67
  %641 = vmatprep.subr.mxu0 %v72
  %642 = vmatpush1.msra.mxu0 %v71
  %643 = vmatprep.subr.mxu0 %v76
  %644 = vmatpush1.msra.mxu0 %v75
  %645 = vmatprep.subr.mxu0 %v80
  %646 = vmatpush1.msra.mxu0 %v79
  %647 = vmatprep.subr.mxu0 0.0
  %648 = vmatpush1.msra.mxu0 0.0
  %649 = vmatprep.subr.mxu0 0.0
  %650 = vmatpush1.msra.mxu0 0.0
  %651 = vmatprep.subr.mxu0 0.0
  %652 = vmatpush1.msra.mxu0 0.0
  %653 = vmatprep.subr.mxu0 0.0
  %654 = vmatpush1.msra.mxu0 0.0
  %655 = vmatprep.subr.mxu0 0.0
  %656 = vmatpush1.msra.mxu0 0.0
  %657 = vmatprep.subr.mxu0 0.0
  %658 = vmatpush1.msra.mxu0 0.0
  %659 = vmatprep.subr.mxu0 0.0
  %660 = vmatpush1.msra.mxu0 0.0
  %661 = vmatprep.subr.mxu0 0.0
  %662 = vmatpush1.msra.mxu0 0.0
  %663 = vmatprep.subr.mxu0 0.0
  %664 = vmatpush1.msra.mxu0 0.0
  %665 = vmatprep.subr.mxu0 0.0
  %666 = vmatpush1.msra.mxu0 0.0
  %667 = vmatprep.subr.mxu0 0.0
  %668 = vmatpush1.msra.mxu0 0.0
  %669 = vmatprep.subr.mxu0 0.0
  %670 = vmatpush1.msra.mxu0 0.0
  %671 = vmatprep.subr.mxu0 0.0
  %672 = vmatpush1.msra.mxu0 0.0
  %673 = vmatprep.subr.mxu0 0.0
  %674 = vmatpush1.msra.mxu0 0.0
  %675 = vmatprep.subr.mxu0 0.0
  %676 = vmatpush1.msra.mxu0 0.0
  %677 = vmatprep.subr.mxu0 0.0
  %678 = vmatpush1.msra.mxu0 0.0
  %679 = vmatprep.mubr.f32.mxu0 0.0
  %680 = vmatmul.mubr.f32.gmra.mrb[0].mxu0 %v608
  %v681 = vpop.f32.mrb[0].mxu0
  %v682 = vadd.f32 0.0, %v681
  %v683 = vpop.f32.mrb[0].mxu0
  %v684 = vadd.f32 0.0, %v683
  %685 = vdwg.mxu0
  %686 = vmatprep.subr.mxu0 %v22
  %687 = vmatpush1.msra.mxu0 %v21
  %688 = vmatprep.subr.mxu0 %v26
  %689 = vmatpush1.msra.mxu0 %v25
  %690 = vmatprep.subr.mxu0 %v30
  %691 = vmatpush1.msra.mxu0 %v29
  %692 = vmatprep.subr.mxu0 %v34
  %693 = vmatpush1.msra.mxu0 %v33
  %694 = vmatprep.subr.mxu0 %v38
  %695 = vmatpush1.msra.mxu0 %v37
  %696 = vmatprep.subr.mxu0 %v42
  %697 = vmatpush1.msra.mxu0 %v41
  %698 = vmatprep.subr.mxu0 %v46
  %699 = vmatpush1.msra.mxu0 %v45
  %700 = vmatprep.subr.mxu0 %v50
  %701 = vmatpush1.msra.mxu0 %v49
  %702 = vmatprep.subr.mxu0 %v54
  %703 = vmatpush1.msra.mxu0 %v53
  %704 = vmatprep.subr.mxu0 %v58
  %705 = vmatpush1.msra.mxu0 %v57
  %706 = vmatprep.subr.mxu0 %v62
  %707 = vmatpush1.msra.mxu0 %v61
  %708 = vmatprep.subr.mxu0 %v66
  %709 = vmatpush1.msra.mxu0 %v65
  %710 = vmatprep.subr.mxu0 %v70
  %711 = vmatpush1.msra.mxu0 %v69
  %712 = vmatprep.subr.mxu0 %v74
  %713 = vmatpush1.msra.mxu0 %v73
  %714 = vmatprep.subr.mxu0 %v78
  %715 = vmatpush1.msra.mxu0 %v77
  %716 = vmatprep.subr.mxu0 %v82
  %717 = vmatpush1.msra.mxu0 %v81
  %718 = vmatprep.subr.mxu0 0.0
  %719 = vmatpush1.msra.mxu0 0.0
  %720 = vmatprep.subr.mxu0 0.0
  %721 = vmatpush1.msra.mxu0 0.0
  %722 = vmatprep.subr.mxu0 0.0
  %723 = vmatpush1.msra.mxu0 0.0
  %724 = vmatprep.subr.mxu0 0.0
  %725 = vmatpush1.msra.mxu0 0.0
  %726 = vmatprep.subr.mxu0 0.0
  %727 = vmatpush1.msra.mxu0 0.0
  %728 = vmatprep.subr.mxu0 0.0
  %729 = vmatpush1.msra.mxu0 0.0
  %730 = vmatprep.subr.mxu0 0.0
  %731 = vmatpush1.msra.mxu0 0.0
  %732 = vmatprep.subr.mxu0 0.0
  %733 = vmatpush1.msra.mxu0 0.0
  %734 = vmatprep.subr.mxu0 0.0
  %735 = vmatpush1.msra.mxu0 0.0
  %736 = vmatprep.subr.mxu0 0.0
  %737 = vmatpush1.msra.mxu0 0.0
  %738 = vmatprep.subr.mxu0 0.0
  %739 = vmatpush1.msra.mxu0 0.0
  %740 = vmatprep.subr.mxu0 0.0
  %741 = vmatpush1.msra.mxu0 0.0
  %742 = vmatprep.subr.mxu0 0.0
  %743 = vmatpush1.msra.mxu0 0.0
  %744 = vmatprep.subr.mxu0 0.0
  %745 = vmatpush1.msra.mxu0 0.0
  %746 = vmatprep.subr.mxu0 0.0
  %747 = vmatpush1.msra.mxu0 0.0
  %748 = vmatprep.subr.mxu0 0.0
  %749 = vmatpush1.msra.mxu0 0.0
  %750 = vmatprep.mubr.f32.mxu0 0.0
  %751 = vmatmul.mubr.f32.gmra.mrb[0].mxu0 %v608
  %v752 = vpop.f32.mrb[0].mxu0
  %v753 = vadd.f32 0.0, %v752
  %v754 = vpop.f32.mrb[0].mxu0
  %v755 = vadd.f32 0.0, %v754
  %756 = vdwg.mxu0
  %v757 = vadd.f32 %v611, %v682
  %v758 = vadd.f32 %v612, %v684
  %v759 = vadd.f32 %v613, %v753
  %v760 = vadd.f32 %v614, %v755
  %v761 = vxor.u32 %v757, 2147483648
  %v762 = vmul.f32 %v761, 1.442695
  %v763 = vpow.pop %v762
  %v764 = vadd.f32 %v763, 1.0
  %v765 = vrcp.pop %v764
  %v766 = vmul.f32 1.0, %v765
  %v767 = vxor.u32 %v758, 2147483648
  %v768 = vmul.f32 %v767, 1.442695
  %v769 = vpow.pop %v768
  %v770 = vadd.f32 %v769, 1.0
  %v771 = vrcp.pop %v770
  %v772 = vmul.f32 1.0, %v771
  %v773 = vtanh.pop %v759
  %v774 = vxor.u32 %v760, 2147483648
  %v775 = vmul.f32 %v774, 1.442695
  %v776 = vpow.pop %v775
  %v777 = vadd.f32 %v776, 1.0
  %v778 = vrcp.pop %v777
  %v779 = vmul.f32 1.0, %v778
  %v780 = vmul.f32 %v772, %v606
  %v781 = vmul.f32 %v766, %v773
  %v782 = vadd.f32 %v780, %v781
  %v783 = vtanh.pop %v782
  %v784 = vmul.f32 %v779, %v783
  %v785 = vadd.f32 %v609, %v784
  %s786 = scalar_lea.vmem %s0, 128
  %v787 = vld [vmem:[%s786] sm:$0xff]
  %v788 = vld [vmem:[%s786 + $0x8] sm:$0xff]
  %v789 = vld [vmem:[%s786 + $0x10] sm:$0xff]
  %v790 = vld [vmem:[%s786 + $0x18] sm:$0xff]
  %791 = vmatprep.subr.mxu0 %v20
  %792 = vmatpush1.msra.mxu0 %v19
  %793 = vmatprep.subr.mxu0 %v24
  %794 = vmatpush1.msra.mxu0 %v23
  %795 = vmatprep.subr.mxu0 %v28
  %796 = vmatpush1.msra.mxu0 %v27
  %797 = vmatprep.subr.mxu0 %v32
  %798 = vmatpush1.msra.mxu0 %v31
  %799 = vmatprep.subr.mxu0 %v36
  %800 = vmatpush1.msra.mxu0 %v35
  %801 = vmatprep.subr.mxu0 %v40
  %802 = vmatpush1.msra.mxu0 %v39
  %803 = vmatprep.subr.mxu0 %v44
  %804 = vmatpush1.msra.mxu0 %v43
  %805 = vmatprep.subr.mxu0 %v48
  %806 = vmatpush1.msra.mxu0 %v47
  %807 = vmatprep.subr.mxu0 %v52
  %808 = vmatpush1.msra.mxu0 %v51
  %809 = vmatprep.subr.mxu0 %v56
  %810 = vmatpush1.msra.mxu0 %v55
  %811 = vmatprep.subr.mxu0 %v60
  %812 = vmatpush1.msra.mxu0 %v59
  %813 = vmatprep.subr.mxu0 %v64
  %814 = vmatpush1.msra.mxu0 %v63
  %815 = vmatprep.subr.mxu0 %v68
  %816 = vmatpush1.msra.mxu0 %v67
  %817 = vmatprep.subr.mxu0 %v72
  %818 = vmatpush1.msra.mxu0 %v71
  %819 = vmatprep.subr.mxu0 %v76
  %820 = vmatpush1.msra.mxu0 %v75
  %821 = vmatprep.subr.mxu0 %v80
  %822 = vmatpush1.msra.mxu0 %v79
  %823 = vmatprep.subr.mxu0 0.0
  %824 = vmatpush1.msra.mxu0 0.0
  %825 = vmatprep.subr.mxu0 0.0
  %826 = vmatpush1.msra.mxu0 0.0
  %827 = vmatprep.subr.mxu0 0.0
  %828 = vmatpush1.msra.mxu0 0.0
  %829 = vmatprep.subr.mxu0 0.0
  %830 = vmatpush1.msra.mxu0 0.0
  %831 = vmatprep.subr.mxu0 0.0
  %832 = vmatpush1.msra.mxu0 0.0
  %833 = vmatprep.subr.mxu0 0.0
  %834 = vmatpush1.msra.mxu0 0.0
  %835 = vmatprep.subr.mxu0 0.0
  %836 = vmatpush1.msra.mxu0 0.0
  %837 = vmatprep.subr.mxu0 0.0
  %838 = vmatpush1.msra.mxu0 0.0
  %839 = vmatprep.subr.mxu0 0.0
  %840 = vmatpush1.msra.mxu0 0.0
  %841 = vmatprep.subr.mxu0 0.0
  %842 = vmatpush1.msra.mxu0 0.0
  %843 = vmatprep.subr.mxu0 0.0
  %844 = vmatpush1.msra.mxu0 0.0
  %845 = vmatprep.subr.mxu0 0.0
  %846 = vmatpush1.msra.mxu0 0.0
  %847 = vmatprep.subr.mxu0 0.0
  %848 = vmatpush1.msra.mxu0 0.0
  %849 = vmatprep.subr.mxu0 0.0
  %850 = vmatpush1.msra.mxu0 0.0
  %851 = vmatprep.subr.mxu0 0.0
  %852 = vmatpush1.msra.mxu0 0.0
  %853 = vmatprep.subr.mxu0 0.0
  %854 = vmatpush1.msra.mxu0 0.0
  %855 = vmatprep.mubr.f32.mxu0 0.0
  %856 = vmatmul.mubr.f32.gmra.mrb[0].mxu0 %v784
  %v857 = vpop.f32.mrb[0].mxu0
  %v858 = vadd.f32 0.0, %v857
  %v859 = vpop.f32.mrb[0].mxu0
  %v860 = vadd.f32 0.0, %v859
  %861 = vdwg.mxu0
  %862 = vmatprep.subr.mxu0 %v22
  %863 = vmatpush1.msra.mxu0 %v21
  %864 = vmatprep.subr.mxu0 %v26
  %865 = vmatpush1.msra.mxu0 %v25
  %866 = vmatprep.subr.mxu0 %v30
  %867 = vmatpush1.msra.mxu0 %v29
  %868 = vmatprep.subr.mxu0 %v34
  %869 = vmatpush1.msra.mxu0 %v33
  %870 = vmatprep.subr.mxu0 %v38
  %871 = vmatpush1.msra.mxu0 %v37
  %872 = vmatprep.subr.mxu0 %v42
  %873 = vmatpush1.msra.mxu0 %v41
  %874 = vmatprep.subr.mxu0 %v46
  %875 = vmatpush1.msra.mxu0 %v45
  %876 = vmatprep.subr.mxu0 %v50
  %877 = vmatpush1.msra.mxu0 %v49
  %878 = vmatprep.subr.mxu0 %v54
  %879 = vmatpush1.msra.mxu0 %v53
  %880 = vmatprep.subr.mxu0 %v58
  %881 = vmatpush1.msra.mxu0 %v57
  %882 = vmatprep.subr.mxu0 %v62
  %883 = vmatpush1.msra.mxu0 %v61
  %884 = vmatprep.subr.mxu0 %v66
  %885 = vmatpush1.msra.mxu0 %v65
  %886 = vmatprep.subr.mxu0 %v70
  %887 = vmatpush1.msra.mxu0 %v69
  %888 = vmatprep.subr.mxu0 %v74
  %889 = vmatpush1.msra.mxu0 %v73
  %890 = vmatprep.subr.mxu0 %v78
  %891 = vmatpush1.msra.mxu0 %v77
  %892 = vmatprep.subr.mxu0 %v82
  %893 = vmatpush1.msra.mxu0 %v81
  %894 = vmatprep.subr.mxu0 0.0
  %895 = vmatpush1.msra.mxu0 0.0
  %896 = vmatprep.subr.mxu0 0.0
  %897 = vmatpush1.msra.mxu0 0.0
  %898 = vmatprep.subr.mxu0 0.0
  %899 = vmatpush1.msra.mxu0 0.0
  %900 = vmatprep.subr.mxu0 0.0
  %901 = vmatpush1.msra.mxu0 0.0
  %902 = vmatprep.subr.mxu0 0.0
  %903 = vmatpush1.msra.mxu0 0.0
  %904 = vmatprep.subr.mxu0 0.0
  %905 = vmatpush1.msra.mxu0 0.0
  %906 = vmatprep.subr.mxu0 0.0
  %907 = vmatpush1.msra.mxu0 0.0
  %908 = vmatprep.subr.mxu0 0.0
  %909 = vmatpush1.msra.mxu0 0.0
  %910 = vmatprep.subr.mxu0 0.0
  %911 = vmatpush1.msra.mxu0 0.0
  %912 = vmatprep.subr.mxu0 0.0
  %913 = vmatpush1.msra.mxu0 0.0
  %914 = vmatprep.subr.mxu0 0.0
  %915 = vmatpush1.msra.mxu0 0.0
  %916 = vmatprep.subr.mxu0 0.0
  %917 = vmatpush1.msra.mxu0 0.0
  %918 = vmatprep.subr.mxu0 0.0
  %919 = vmatpush1.msra.mxu0 0.0
  %920 = vmatprep.subr.mxu0 0.0
  %921 = vmatpush1.msra.mxu0 0.0
  %922 = vmatprep.subr.mxu0 0.0
  %923 = vmatpush1.msra.mxu0 0.0
  %924 = vmatprep.subr.mxu0 0.0
  %925 = vmatpush1.msra.mxu0 0.0
  %926 = vmatprep.mubr.f32.mxu0 0.0
  %927 = vmatmul.mubr.f32.gmra.mrb[0].mxu0 %v784
  %v928 = vpop.f32.mrb[0].mxu0
  %v929 = vadd.f32 0.0, %v928
  %v930 = vpop.f32.mrb[0].mxu0
  %v931 = vadd.f32 0.0, %v930
  %932 = vdwg.mxu0
  %v933 = vadd.f32 %v787, %v858
  %v934 = vadd.f32 %v788, %v860
  %v935 = vadd.f32 %v789, %v929
  %v936 = vadd.f32 %v790, %v931
  %v937 = vxor.u32 %v933, 2147483648
  %v938 = vmul.f32 %v937, 1.442695
  %v939 = vpow.pop %v938
  %v940 = vadd.f32 %v939, 1.0
  %v941 = vrcp.pop %v940
  %v942 = vmul.f32 1.0, %v941
  %v943 = vxor.u32 %v934, 2147483648
  %v944 = vmul.f32 %v943, 1.442695
  %v945 = vpow.pop %v944
  %v946 = vadd.f32 %v945, 1.0
  %v947 = vrcp.pop %v946
  %v948 = vmul.f32 1.0, %v947
  %v949 = vtanh.pop %v935
  %v950 = vxor.u32 %v936, 2147483648
  %v951 = vmul.f32 %v950, 1.442695
  %v952 = vpow.pop %v951
  %v953 = vadd.f32 %v952, 1.0
  %v954 = vrcp.pop %v953
  %v955 = vmul.f32 1.0, %v954
  %v956 = vmul.f32 %v948, %v782
  %v957 = vmul.f32 %v942, %v949
  %v958 = vadd.f32 %v956, %v957
  %v959 = vtanh.pop %v958
  %v960 = vmul.f32 %v955, %v959
  %v961 = vadd.f32 %v785, %v960
  %s962 = scalar_lea.vmem %s0, 160
  %v963 = vld [vmem:[%s962] sm:$0xff]
  %v964 = vld [vmem:[%s962 + $0x8] sm:$0xff]
  %v965 = vld [vmem:[%s962 + $0x10] sm:$0xff]
  %v966 = vld [vmem:[%s962 + $0x18] sm:$0xff]
  %967 = vmatprep.subr.mxu0 %v20
  %968 = vmatpush1.msra.mxu0 %v19
  %969 = vmatprep.subr.mxu0 %v24
  %970 = vmatpush1.msra.mxu0 %v23
  %971 = vmatprep.subr.mxu0 %v28
  %972 = vmatpush1.msra.mxu0 %v27
  %973 = vmatprep.subr.mxu0 %v32
  %974 = vmatpush1.msra.mxu0 %v31
  %975 = vmatprep.subr.mxu0 %v36
  %976 = vmatpush1.msra.mxu0 %v35
  %977 = vmatprep.subr.mxu0 %v40
  %978 = vmatpush1.msra.mxu0 %v39
  %979 = vmatprep.subr.mxu0 %v44
  %980 = vmatpush1.msra.mxu0 %v43
  %981 = vmatprep.subr.mxu0 %v48
  %982 = vmatpush1.msra.mxu0 %v47
  %983 = vmatprep.subr.mxu0 %v52
  %984 = vmatpush1.msra.mxu0 %v51
  %985 = vmatprep.subr.mxu0 %v56
  %986 = vmatpush1.msra.mxu0 %v55
  %987 = vmatprep.subr.mxu0 %v60
  %988 = vmatpush1.msra.mxu0 %v59
  %989 = vmatprep.subr.mxu0 %v64
  %990 = vmatpush1.msra.mxu0 %v63
  %991 = vmatprep.subr.mxu0 %v68
  %992 = vmatpush1.msra.mxu0 %v67
  %993 = vmatprep.subr.mxu0 %v72
  %994 = vmatpush1.msra.mxu0 %v71
  %995 = vmatprep.subr.mxu0 %v76
  %996 = vmatpush1.msra.mxu0 %v75
  %997 = vmatprep.subr.mxu0 %v80
  %998 = vmatpush1.msra.mxu0 %v79
  %999 = vmatprep.subr.mxu0 0.0
  %1000 = vmatpush1.msra.mxu0 0.0
  %1001 = vmatprep.subr.mxu0 0.0
  %1002 = vmatpush1.msra.mxu0 0.0
  %1003 = vmatprep.subr.mxu0 0.0
  %1004 = vmatpush1.msra.mxu0 0.0
  %1005 = vmatprep.subr.mxu0 0.0
  %1006 = vmatpush1.msra.mxu0 0.0
  %1007 = vmatprep.subr.mxu0 0.0
  %1008 = vmatpush1.msra.mxu0 0.0
  %1009 = vmatprep.subr.mxu0 0.0
  %1010 = vmatpush1.msra.mxu0 0.0
  %1011 = vmatprep.subr.mxu0 0.0
  %1012 = vmatpush1.msra.mxu0 0.0
  %1013 = vmatprep.subr.mxu0 0.0
  %1014 = vmatpush1.msra.mxu0 0.0
  %1015 = vmatprep.subr.mxu0 0.0
  %1016 = vmatpush1.msra.mxu0 0.0
  %1017 = vmatprep.subr.mxu0 0.0
  %1018 = vmatpush1.msra.mxu0 0.0
  %1019 = vmatprep.subr.mxu0 0.0
  %1020 = vmatpush1.msra.mxu0 0.0
  %1021 = vmatprep.subr.mxu0 0.0
  %1022 = vmatpush1.msra.mxu0 0.0
  %1023 = vmatprep.subr.mxu0 0.0
  %1024 = vmatpush1.msra.mxu0 0.0
  %1025 = vmatprep.subr.mxu0 0.0
  %1026 = vmatpush1.msra.mxu0 0.0
  %1027 = vmatprep.subr.mxu0 0.0
  %1028 = vmatpush1.msra.mxu0 0.0
  %1029 = vmatprep.subr.mxu0 0.0
  %1030 = vmatpush1.msra.mxu0 0.0
  %1031 = vmatprep.mubr.f32.mxu0 0.0
  %1032 = vmatmul.mubr.f32.gmra.mrb[0].mxu0 %v960
  %v1033 = vpop.f32.mrb[0].mxu0
  %v1034 = vadd.f32 0.0, %v1033
  %v1035 = vpop.f32.mrb[0].mxu0
  %v1036 = vadd.f32 0.0, %v1035
  %1037 = vdwg.mxu0
  %1038 = vmatprep.subr.mxu0 %v22
  %1039 = vmatpush1.msra.mxu0 %v21
  %1040 = vmatprep.subr.mxu0 %v26
  %1041 = vmatpush1.msra.mxu0 %v25
  %1042 = vmatprep.subr.mxu0 %v30
  %1043 = vmatpush1.msra.mxu0 %v29
  %1044 = vmatprep.subr.mxu0 %v34
  %1045 = vmatpush1.msra.mxu0 %v33
  %1046 = vmatprep.subr.mxu0 %v38
  %1047 = vmatpush1.msra.mxu0 %v37
  %1048 = vmatprep.subr.mxu0 %v42
  %1049 = vmatpush1.msra.mxu0 %v41
  %1050 = vmatprep.subr.mxu0 %v46
  %1051 = vmatpush1.msra.mxu0 %v45
  %1052 = vmatprep.subr.mxu0 %v50
  %1053 = vmatpush1.msra.mxu0 %v49
  %1054 = vmatprep.subr.mxu0 %v54
  %1055 = vmatpush1.msra.mxu0 %v53
  %1056 = vmatprep.subr.mxu0 %v58
  %1057 = vmatpush1.msra.mxu0 %v57
  %1058 = vmatprep.subr.mxu0 %v62
  %1059 = vmatpush1.msra.mxu0 %v61
  %1060 = vmatprep.subr.mxu0 %v66
  %1061 = vmatpush1.msra.mxu0 %v65
  %1062 = vmatprep.subr.mxu0 %v70
  %1063 = vmatpush1.msra.mxu0 %v69
  %1064 = vmatprep.subr.mxu0 %v74
  %1065 = vmatpush1.msra.mxu0 %v73
  %1066 = vmatprep.subr.mxu0 %v78
  %1067 = vmatpush1.msra.mxu0 %v77
  %1068 = vmatprep.subr.mxu0 %v82
  %1069 = vmatpush1.msra.mxu0 %v81
  %1070 = vmatprep.subr.mxu0 0.0
  %1071 = vmatpush1.msra.mxu0 0.0
  %1072 = vmatprep.subr.mxu0 0.0
  %1073 = vmatpush1.msra.mxu0 0.0
  %1074 = vmatprep.subr.mxu0 0.0
  %1075 = vmatpush1.msra.mxu0 0.0
  %1076 = vmatprep.subr.mxu0 0.0
  %1077 = vmatpush1.msra.mxu0 0.0
  %1078 = vmatprep.subr.mxu0 0.0
  %1079 = vmatpush1.msra.mxu0 0.0
  %1080 = vmatprep.subr.mxu0 0.0
  %1081 = vmatpush1.msra.mxu0 0.0
  %1082 = vmatprep.subr.mxu0 0.0
  %1083 = vmatpush1.msra.mxu0 0.0
  %1084 = vmatprep.subr.mxu0 0.0
  %1085 = vmatpush1.msra.mxu0 0.0
  %1086 = vmatprep.subr.mxu0 0.0
  %1087 = vmatpush1.msra.mxu0 0.0
  %1088 = vmatprep.subr.mxu0 0.0
  %1089 = vmatpush1.msra.mxu0 0.0
  %1090 = vmatprep.subr.mxu0 0.0
  %1091 = vmatpush1.msra.mxu0 0.0
  %1092 = vmatprep.subr.mxu0 0.0
  %1093 = vmatpush1.msra.mxu0 0.0
  %1094 = vmatprep.subr.mxu0 0.0
  %1095 = vmatpush1.msra.mxu0 0.0
  %1096 = vmatprep.subr.mxu0 0.0
  %1097 = vmatpush1.msra.mxu0 0.0
  %1098 = vmatprep.subr.mxu0 0.0
  %1099 = vmatpush1.msra.mxu0 0.0
  %1100 = vmatprep.subr.mxu0 0.0
  %1101 = vmatpush1.msra.mxu0 0.0
  %1102 = vmatprep.mubr.f32.mxu0 0.0
  %1103 = vmatmul.mubr.f32.gmra.mrb[0].mxu0 %v960
  %v1104 = vpop.f32.mrb[0].mxu0
  %v1105 = vadd.f32 0.0, %v1104
  %v1106 = vpop.f32.mrb[0].mxu0
  %v1107 = vadd.f32 0.0, %v1106
  %1108 = vdwg.mxu0
  %v1109 = vadd.f32 %v963, %v1034
  %v1110 = vadd.f32 %v964, %v1036
  %v1111 = vadd.f32 %v965, %v1105
  %v1112 = vadd.f32 %v966, %v1107
  %v1113 = vxor.u32 %v1109, 2147483648
  %v1114 = vmul.f32 %v1113, 1.442695
  %v1115 = vpow.pop %v1114
  %v1116 = vadd.f32 %v1115, 1.0
  %v1117 = vrcp.pop %v1116
  %v1118 = vmul.f32 1.0, %v1117
  %v1119 = vxor.u32 %v1110, 2147483648
  %v1120 = vmul.f32 %v1119, 1.442695
  %v1121 = vpow.pop %v1120
  %v1122 = vadd.f32 %v1121, 1.0
  %v1123 = vrcp.pop %v1122
  %v1124 = vmul.f32 1.0, %v1123
  %v1125 = vtanh.pop %v1111
  %v1126 = vxor.u32 %v1112, 2147483648
  %v1127 = vmul.f32 %v1126, 1.442695
  %v1128 = vpow.pop %v1127
  %v1129 = vadd.f32 %v1128, 1.0
  %v1130 = vrcp.pop %v1129
  %v1131 = vmul.f32 1.0, %v1130
  %v1132 = vmul.f32 %v1124, %v958
  %v1133 = vmul.f32 %v1118, %v1125
  %v1134 = vadd.f32 %v1132, %v1133
  %v1135 = vtanh.pop %v1134
  %v1136 = vmul.f32 %v1131, %v1135
  %v1137 = vadd.f32 %v961, %v1136
  %s1138 = scalar_lea.vmem %s0, 192
  %v1139 = vld [vmem:[%s1138] sm:$0xff]
  %v1140 = vld [vmem:[%s1138 + $0x8] sm:$0xff]
  %v1141 = vld [vmem:[%s1138 + $0x10] sm:$0xff]
  %v1142 = vld [vmem:[%s1138 + $0x18] sm:$0xff]
  %1143 = vmatprep.subr.mxu0 %v20
  %1144 = vmatpush1.msra.mxu0 %v19
  %1145 = vmatprep.subr.mxu0 %v24
  %1146 = vmatpush1.msra.mxu0 %v23
  %1147 = vmatprep.subr.mxu0 %v28
  %1148 = vmatpush1.msra.mxu0 %v27
  %1149 = vmatprep.subr.mxu0 %v32
  %1150 = vmatpush1.msra.mxu0 %v31
  %1151 = vmatprep.subr.mxu0 %v36
  %1152 = vmatpush1.msra.mxu0 %v35
  %1153 = vmatprep.subr.mxu0 %v40
  %1154 = vmatpush1.msra.mxu0 %v39
  %1155 = vmatprep.subr.mxu0 %v44
  %1156 = vmatpush1.msra.mxu0 %v43
  %1157 = vmatprep.subr.mxu0 %v48
  %1158 = vmatpush1.msra.mxu0 %v47
  %1159 = vmatprep.subr.mxu0 %v52
  %1160 = vmatpush1.msra.mxu0 %v51
  %1161 = vmatprep.subr.mxu0 %v56
  %1162 = vmatpush1.msra.mxu0 %v55
  %1163 = vmatprep.subr.mxu0 %v60
  %1164 = vmatpush1.msra.mxu0 %v59
  %1165 = vmatprep.subr.mxu0 %v64
  %1166 = vmatpush1.msra.mxu0 %v63
  %1167 = vmatprep.subr.mxu0 %v68
  %1168 = vmatpush1.msra.mxu0 %v67
  %1169 = vmatprep.subr.mxu0 %v72
  %1170 = vmatpush1.msra.mxu0 %v71
  %1171 = vmatprep.subr.mxu0 %v76
  %1172 = vmatpush1.msra.mxu0 %v75
  %1173 = vmatprep.subr.mxu0 %v80
  %1174 = vmatpush1.msra.mxu0 %v79
  %1175 = vmatprep.subr.mxu0 0.0
  %1176 = vmatpush1.msra.mxu0 0.0
  %1177 = vmatprep.subr.mxu0 0.0
  %1178 = vmatpush1.msra.mxu0 0.0
  %1179 = vmatprep.subr.mxu0 0.0
  %1180 = vmatpush1.msra.mxu0 0.0
  %1181 = vmatprep.subr.mxu0 0.0
  %1182 = vmatpush1.msra.mxu0 0.0
  %1183 = vmatprep.subr.mxu0 0.0
  %1184 = vmatpush1.msra.mxu0 0.0
  %1185 = vmatprep.subr.mxu0 0.0
  %1186 = vmatpush1.msra.mxu0 0.0
  %1187 = vmatprep.subr.mxu0 0.0
  %1188 = vmatpush1.msra.mxu0 0.0
  %1189 = vmatprep.subr.mxu0 0.0
  %1190 = vmatpush1.msra.mxu0 0.0
  %1191 = vmatprep.subr.mxu0 0.0
  %1192 = vmatpush1.msra.mxu0 0.0
  %1193 = vmatprep.subr.mxu0 0.0
  %1194 = vmatpush1.msra.mxu0 0.0
  %1195 = vmatprep.subr.mxu0 0.0
  %1196 = vmatpush1.msra.mxu0 0.0
  %1197 = vmatprep.subr.mxu0 0.0
  %1198 = vmatpush1.msra.mxu0 0.0
  %1199 = vmatprep.subr.mxu0 0.0
  %1200 = vmatpush1.msra.mxu0 0.0
  %1201 = vmatprep.subr.mxu0 0.0
  %1202 = vmatpush1.msra.mxu0 0.0
  %1203 = vmatprep.subr.mxu0 0.0
  %1204 = vmatpush1.msra.mxu0 0.0
  %1205 = vmatprep.subr.mxu0 0.0
  %1206 = vmatpush1.msra.mxu0 0.0
  %1207 = vmatprep.mubr.f32.mxu0 0.0
  %1208 = vmatmul.mubr.f32.gmra.mrb[0].mxu0 %v1136
  %v1209 = vpop.f32.mrb[0].mxu0
  %v1210 = vadd.f32 0.0, %v1209
  %v1211 = vpop.f32.mrb[0].mxu0
  %v1212 = vadd.f32 0.0, %v1211
  %1213 = vdwg.mxu0
  %1214 = vmatprep.subr.mxu0 %v22
  %1215 = vmatpush1.msra.mxu0 %v21
  %1216 = vmatprep.subr.mxu0 %v26
  %1217 = vmatpush1.msra.mxu0 %v25
  %1218 = vmatprep.subr.mxu0 %v30
  %1219 = vmatpush1.msra.mxu0 %v29
  %1220 = vmatprep.subr.mxu0 %v34
  %1221 = vmatpush1.msra.mxu0 %v33
  %1222 = vmatprep.subr.mxu0 %v38
  %1223 = vmatpush1.msra.mxu0 %v37
  %1224 = vmatprep.subr.mxu0 %v42
  %1225 = vmatpush1.msra.mxu0 %v41
  %1226 = vmatprep.subr.mxu0 %v46
  %1227 = vmatpush1.msra.mxu0 %v45
  %1228 = vmatprep.subr.mxu0 %v50
  %1229 = vmatpush1.msra.mxu0 %v49
  %1230 = vmatprep.subr.mxu0 %v54
  %1231 = vmatpush1.msra.mxu0 %v53
  %1232 = vmatprep.subr.mxu0 %v58
  %1233 = vmatpush1.msra.mxu0 %v57
  %1234 = vmatprep.subr.mxu0 %v62
  %1235 = vmatpush1.msra.mxu0 %v61
  %1236 = vmatprep.subr.mxu0 %v66
  %1237 = vmatpush1.msra.mxu0 %v65
  %1238 = vmatprep.subr.mxu0 %v70
  %1239 = vmatpush1.msra.mxu0 %v69
  %1240 = vmatprep.subr.mxu0 %v74
  %1241 = vmatpush1.msra.mxu0 %v73
  %1242 = vmatprep.subr.mxu0 %v78
  %1243 = vmatpush1.msra.mxu0 %v77
  %1244 = vmatprep.subr.mxu0 %v82
  %1245 = vmatpush1.msra.mxu0 %v81
  %1246 = vmatprep.subr.mxu0 0.0
  %1247 = vmatpush1.msra.mxu0 0.0
  %1248 = vmatprep.subr.mxu0 0.0
  %1249 = vmatpush1.msra.mxu0 0.0
  %1250 = vmatprep.subr.mxu0 0.0
  %1251 = vmatpush1.msra.mxu0 0.0
  %1252 = vmatprep.subr.mxu0 0.0
  %1253 = vmatpush1.msra.mxu0 0.0
  %1254 = vmatprep.subr.mxu0 0.0
  %1255 = vmatpush1.msra.mxu0 0.0
  %1256 = vmatprep.subr.mxu0 0.0
  %1257 = vmatpush1.msra.mxu0 0.0
  %1258 = vmatprep.subr.mxu0 0.0
  %1259 = vmatpush1.msra.mxu0 0.0
  %1260 = vmatprep.subr.mxu0 0.0
  %1261 = vmatpush1.msra.mxu0 0.0
  %1262 = vmatprep.subr.mxu0 0.0
  %1263 = vmatpush1.msra.mxu0 0.0
  %1264 = vmatprep.subr.mxu0 0.0
  %1265 = vmatpush1.msra.mxu0 0.0
  %1266 = vmatprep.subr.mxu0 0.0
  %1267 = vmatpush1.msra.mxu0 0.0
  %1268 = vmatprep.subr.mxu0 0.0
  %1269 = vmatpush1.msra.mxu0 0.0
  %1270 = vmatprep.subr.mxu0 0.0
  %1271 = vmatpush1.msra.mxu0 0.0
  %1272 = vmatprep.subr.mxu0 0.0
  %1273 = vmatpush1.msra.mxu0 0.0
  %1274 = vmatprep.subr.mxu0 0.0
  %1275 = vmatpush1.msra.mxu0 0.0
  %1276 = vmatprep.subr.mxu0 0.0
  %1277 = vmatpush1.msra.mxu0 0.0
  %1278 = vmatprep.mubr.f32.mxu0 0.0
  %1279 = vmatmul.mubr.f32.gmra.mrb[0].mxu0 %v1136
  %v1280 = vpop.f32.mrb[0].mxu0
  %v1281 = vadd.f32 0.0, %v1280
  %v1282 = vpop.f32.mrb[0].mxu0
  %v1283 = vadd.f32 0.0, %v1282
  %1284 = vdwg.mxu0
  %v1285 = vadd.f32 %v1139, %v1210
  %v1286 = vadd.f32 %v1140, %v1212
  %v1287 = vadd.f32 %v1141, %v1281
  %v1288 = vadd.f32 %v1142, %v1283
  %v1289 = vxor.u32 %v1285, 2147483648
  %v1290 = vmul.f32 %v1289, 1.442695
  %v1291 = vpow.pop %v1290
  %v1292 = vadd.f32 %v1291, 1.0
  %v1293 = vrcp.pop %v1292
  %v1294 = vmul.f32 1.0, %v1293
  %v1295 = vxor.u32 %v1286, 2147483648
  %v1296 = vmul.f32 %v1295, 1.442695
  %v1297 = vpow.pop %v1296
  %v1298 = vadd.f32 %v1297, 1.0
  %v1299 = vrcp.pop %v1298
  %v1300 = vmul.f32 1.0, %v1299
  %v1301 = vtanh.pop %v1287
  %v1302 = vxor.u32 %v1288, 2147483648
  %v1303 = vmul.f32 %v1302, 1.442695
  %v1304 = vpow.pop %v1303
  %v1305 = vadd.f32 %v1304, 1.0
  %v1306 = vrcp.pop %v1305
  %v1307 = vmul.f32 1.0, %v1306
  %v1308 = vmul.f32 %v1300, %v1134
  %v1309 = vmul.f32 %v1294, %v1301
  %v1310 = vadd.f32 %v1308, %v1309
  %v1311 = vtanh.pop %v1310
  %v1312 = vmul.f32 %v1307, %v1311
  %v1313 = vadd.f32 %v1137, %v1312
  %s1314 = scalar_lea.vmem %s0, 224
  %v1315 = vld [vmem:[%s1314] sm:$0xff]
  %v1316 = vld [vmem:[%s1314 + $0x8] sm:$0xff]
  %v1317 = vld [vmem:[%s1314 + $0x10] sm:$0xff]
  %v1318 = vld [vmem:[%s1314 + $0x18] sm:$0xff]
  %1319 = vmatprep.subr.mxu0 %v20
  %1320 = vmatpush1.msra.mxu0 %v19
  %1321 = vmatprep.subr.mxu0 %v24
  %1322 = vmatpush1.msra.mxu0 %v23
  %1323 = vmatprep.subr.mxu0 %v28
  %1324 = vmatpush1.msra.mxu0 %v27
  %1325 = vmatprep.subr.mxu0 %v32
  %1326 = vmatpush1.msra.mxu0 %v31
  %1327 = vmatprep.subr.mxu0 %v36
  %1328 = vmatpush1.msra.mxu0 %v35
  %1329 = vmatprep.subr.mxu0 %v40
  %1330 = vmatpush1.msra.mxu0 %v39
  %1331 = vmatprep.subr.mxu0 %v44
  %1332 = vmatpush1.msra.mxu0 %v43
  %1333 = vmatprep.subr.mxu0 %v48
  %1334 = vmatpush1.msra.mxu0 %v47
  %1335 = vmatprep.subr.mxu0 %v52
  %1336 = vmatpush1.msra.mxu0 %v51
  %1337 = vmatprep.subr.mxu0 %v56
  %1338 = vmatpush1.msra.mxu0 %v55
  %1339 = vmatprep.subr.mxu0 %v60
  %1340 = vmatpush1.msra.mxu0 %v59
  %1341 = vmatprep.subr.mxu0 %v64
  %1342 = vmatpush1.msra.mxu0 %v63
  %1343 = vmatprep.subr.mxu0 %v68
  %1344 = vmatpush1.msra.mxu0 %v67
  %1345 = vmatprep.subr.mxu0 %v72
  %1346 = vmatpush1.msra.mxu0 %v71
  %1347 = vmatprep.subr.mxu0 %v76
  %1348 = vmatpush1.msra.mxu0 %v75
  %1349 = vmatprep.subr.mxu0 %v80
  %1350 = vmatpush1.msra.mxu0 %v79
  %1351 = vmatprep.subr.mxu0 0.0
  %1352 = vmatpush1.msra.mxu0 0.0
  %1353 = vmatprep.subr.mxu0 0.0
  %1354 = vmatpush1.msra.mxu0 0.0
  %1355 = vmatprep.subr.mxu0 0.0
  %1356 = vmatpush1.msra.mxu0 0.0
  %1357 = vmatprep.subr.mxu0 0.0
  %1358 = vmatpush1.msra.mxu0 0.0
  %1359 = vmatprep.subr.mxu0 0.0
  %1360 = vmatpush1.msra.mxu0 0.0
  %1361 = vmatprep.subr.mxu0 0.0
  %1362 = vmatpush1.msra.mxu0 0.0
  %1363 = vmatprep.subr.mxu0 0.0
  %1364 = vmatpush1.msra.mxu0 0.0
  %1365 = vmatprep.subr.mxu0 0.0
  %1366 = vmatpush1.msra.mxu0 0.0
  %1367 = vmatprep.subr.mxu0 0.0
  %1368 = vmatpush1.msra.mxu0 0.0
  %1369 = vmatprep.subr.mxu0 0.0
  %1370 = vmatpush1.msra.mxu0 0.0
  %1371 = vmatprep.subr.mxu0 0.0
  %1372 = vmatpush1.msra.mxu0 0.0
  %1373 = vmatprep.subr.mxu0 0.0
  %1374 = vmatpush1.msra.mxu0 0.0
  %1375 = vmatprep.subr.mxu0 0.0
  %1376 = vmatpush1.msra.mxu0 0.0
  %1377 = vmatprep.subr.mxu0 0.0
  %1378 = vmatpush1.msra.mxu0 0.0
  %1379 = vmatprep.subr.mxu0 0.0
  %1380 = vmatpush1.msra.mxu0 0.0
  %1381 = vmatprep.subr.mxu0 0.0
  %1382 = vmatpush1.msra.mxu0 0.0
  %1383 = vmatprep.mubr.f32.mxu0 0.0
  %1384 = vmatmul.mubr.f32.gmra.mrb[0].mxu0 %v1312
  %v1385 = vpop.f32.mrb[0].mxu0
  %v1386 = vadd.f32 0.0, %v1385
  %v1387 = vpop.f32.mrb[0].mxu0
  %v1388 = vadd.f32 0.0, %v1387
  %1389 = vdwg.mxu0
  %1390 = vmatprep.subr.mxu0 %v22
  %1391 = vmatpush1.msra.mxu0 %v21
  %1392 = vmatprep.subr.mxu0 %v26
  %1393 = vmatpush1.msra.mxu0 %v25
  %1394 = vmatprep.subr.mxu0 %v30
  %1395 = vmatpush1.msra.mxu0 %v29
  %1396 = vmatprep.subr.mxu0 %v34
  %1397 = vmatpush1.msra.mxu0 %v33
  %1398 = vmatprep.subr.mxu0 %v38
  %1399 = vmatpush1.msra.mxu0 %v37
  %1400 = vmatprep.subr.mxu0 %v42
  %1401 = vmatpush1.msra.mxu0 %v41
  %1402 = vmatprep.subr.mxu0 %v46
  %1403 = vmatpush1.msra.mxu0 %v45
  %1404 = vmatprep.subr.mxu0 %v50
  %1405 = vmatpush1.msra.mxu0 %v49
  %1406 = vmatprep.subr.mxu0 %v54
  %1407 = vmatpush1.msra.mxu0 %v53
  %1408 = vmatprep.subr.mxu0 %v58
  %1409 = vmatpush1.msra.mxu0 %v57
  %1410 = vmatprep.subr.mxu0 %v62
  %1411 = vmatpush1.msra.mxu0 %v61
  %1412 = vmatprep.subr.mxu0 %v66
  %1413 = vmatpush1.msra.mxu0 %v65
  %1414 = vmatprep.subr.mxu0 %v70
  %1415 = vmatpush1.msra.mxu0 %v69
  %1416 = vmatprep.subr.mxu0 %v74
  %1417 = vmatpush1.msra.mxu0 %v73
  %1418 = vmatprep.subr.mxu0 %v78
  %1419 = vmatpush1.msra.mxu0 %v77
  %1420 = vmatprep.subr.mxu0 %v82
  %1421 = vmatpush1.msra.mxu0 %v81
  %1422 = vmatprep.subr.mxu0 0.0
  %1423 = vmatpush1.msra.mxu0 0.0
  %1424 = vmatprep.subr.mxu0 0.0
  %1425 = vmatpush1.msra.mxu0 0.0
  %1426 = vmatprep.subr.mxu0 0.0
  %1427 = vmatpush1.msra.mxu0 0.0
  %1428 = vmatprep.subr.mxu0 0.0
  %1429 = vmatpush1.msra.mxu0 0.0
  %1430 = vmatprep.subr.mxu0 0.0
  %1431 = vmatpush1.msra.mxu0 0.0
  %1432 = vmatprep.subr.mxu0 0.0
  %1433 = vmatpush1.msra.mxu0 0.0
  %1434 = vmatprep.subr.mxu0 0.0
  %1435 = vmatpush1.msra.mxu0 0.0
  %1436 = vmatprep.subr.mxu0 0.0
  %1437 = vmatpush1.msra.mxu0 0.0
  %1438 = vmatprep.subr.mxu0 0.0
  %1439 = vmatpush1.msra.mxu0 0.0
  %1440 = vmatprep.subr.mxu0 0.0
  %1441 = vmatpush1.msra.mxu0 0.0
  %1442 = vmatprep.subr.mxu0 0.0
  %1443 = vmatpush1.msra.mxu0 0.0
  %1444 = vmatprep.subr.mxu0 0.0
  %1445 = vmatpush1.msra.mxu0 0.0
  %1446 = vmatprep.subr.mxu0 0.0
  %1447 = vmatpush1.msra.mxu0 0.0
  %1448 = vmatprep.subr.mxu0 0.0
  %1449 = vmatpush1.msra.mxu0 0.0
  %1450 = vmatprep.subr.mxu0 0.0
  %1451 = vmatpush1.msra.mxu0 0.0
  %1452 = vmatprep.subr.mxu0 0.0
  %1453 = vmatpush1.msra.mxu0 0.0
  %1454 = vmatprep.mubr.f32.mxu0 0.0
  %1455 = vmatmul.mubr.f32.gmra.mrb[0].mxu0 %v1312
  %v1456 = vpop.f32.mrb[0].mxu0
  %v1457 = vadd.f32 0.0, %v1456
  %v1458 = vpop.f32.mrb[0].mxu0
  %v1459 = vadd.f32 0.0, %v1458
  %1460 = vdwg.mxu0
  %v1461 = vadd.f32 %v1315, %v1386
  %v1462 = vadd.f32 %v1316, %v1388
  %v1463 = vadd.f32 %v1317, %v1457
  %v1464 = vadd.f32 %v1318, %v1459
  %v1465 = vxor.u32 %v1461, 2147483648
  %v1466 = vmul.f32 %v1465, 1.442695
  %v1467 = vpow.pop %v1466
  %v1468 = vadd.f32 %v1467, 1.0
  %v1469 = vrcp.pop %v1468
  %v1470 = vmul.f32 1.0, %v1469
  %v1471 = vxor.u32 %v1462, 2147483648
  %v1472 = vmul.f32 %v1471, 1.442695
  %v1473 = vpow.pop %v1472
  %v1474 = vadd.f32 %v1473, 1.0
  %v1475 = vrcp.pop %v1474
  %v1476 = vmul.f32 1.0, %v1475
  %v1477 = vtanh.pop %v1463
  %v1478 = vxor.u32 %v1464, 2147483648
  %v1479 = vmul.f32 %v1478, 1.442695
  %v1480 = vpow.pop %v1479
  %v1481 = vadd.f32 %v1480, 1.0
  %v1482 = vrcp.pop %v1481
  %v1483 = vmul.f32 1.0, %v1482
  %v1484 = vmul.f32 %v1476, %v1310
  %v1485 = vmul.f32 %v1470, %v1477
  %v1486 = vadd.f32 %v1484, %v1485
  %v1487 = vtanh.pop %v1486
  %v1488 = vmul.f32 %v1483, %v1487
  %v1489 = vadd.f32 %v1313, %v1488
  %v1490 = vmul.f32 %v1489, 0.125
  %v1491 = vld [vmem:[%s2] sm:$0x1]
  %v1493 = vlaneseq
  %v1494 = vshrl.u32 %v1493, 7
  %v1495 = vsub.s32 0, %v1494
  %v1496 = vrot.slane %v1491, %v1495
  %v1498 = vmul.f32 %v1490, %v1496
  %1499 = vadd.xlane.f32.xlu0 %v1498
  %v1500 = vpop.xlane.xlu0 %1499
  %v1501 = vld [vmem:[#allocation2] sm:$0x1]
  %v1503 = vlaneseq
  %v1504 = vshrl.u32 %v1503, 7
  %v1505 = vsub.s32 0, %v1504
  %v1506 = vrot.slane %v1501, %v1505
  %v1508 = vadd.f32 %v1500, %v1506
  %v1509 = vxor.u32 %v1508, 2147483648
  %v1510 = vmul.f32 %v1509, 1.442695
  %v1511 = vpow.pop %v1510
  %v1512 = vadd.f32 %v1511, 1.0
  %v1513 = vrcp.pop %v1512
  %v1514 = vmul.f32 1.0, %v1513
  %vm1515 = vcmask 7168
  %1516 = vst.msk [vmem:[%s4] sm:$0xff] %vm1515, %v1514
  // Predicated region
  $region18: #{lstm_model_forward.1} parent=0 // pred_check
    _
  $region19: #{lstm_model_forward.1} parent=0 // pred_check_branch
    %1518 = sbr.rel (0) target = $region21
  $region20: #{lstm_model_forward.1} parent=0 // pred_region
    _
  $region21: #{lstm_model_forward.1} parent=0 // pred_fallthru
    _
  // Predicated region
  $region22: #{lstm_model_forward.1} parent=0 // pred_check
    _
  $region23: #{lstm_model_forward.1} parent=0 // pred_check_branch
    %1520 = sbr.rel (0) target = $region25
  $region24: #{lstm_model_forward.1} parent=0 // pred_region
    _
  $region25: #{lstm_model_forward.1} parent=0 // pred_fallthru
    _

</llo_original>
